<compile_context>
chip_gen: v7x
topology: tpu7x:2x2x1
jax: 0.10.0
libtpu: 0.0.40
codegen_flags: <defaults>
</compile_context>

<pallas_src>
import functools

import jax
import jax.numpy as jnp
from jax import lax
from jax.experimental import pallas as pl
from jax.experimental.pallas import tpu as pltpu


def _round_up(x, m):
    return (x + m - 1) // m * m


def _pick_batch_tile(B, target=128):
    """Full B when small; otherwise the largest multiple-of-8 divisor of B
    <= target, enabling the 'parallel' batch grid axis (2 TCs on v7x) without
    masked sublane stores."""
    if B <= target or B % 8 != 0:
        return B
    bt = 8
    for c in range(8, target + 1, 8):
        if B % c == 0:
            bt = c
    return bt


def _pick_time_chunk(bt, I, hp, vmem_budget_bytes, max_chunk):
    """Largest timestep chunk whose kernel VMEM footprint fits the budget
    (keeps a tile that compiles on v5e/v6e from OOMing on v7x's 64 MiB)."""
    def footprint(tb):
        resident = (I * 3 * hp + hp * 3 * hp) * 2          # W_ih, W_hh (bf16)
        resident += (3 * hp + hp) * 4                       # folded bias, b_hh_n (f32)
        resident += 2 * bt * hp * 4                         # h0 block + h_n/carry block
        streams = 2 * tb * bt * I * 2                       # x chunk, double-buffered (bf16)
        streams += 2 * tb * bt * hp * 4                      # out chunk, double-buffered (f32)
        scratch = tb * bt * 3 * hp * 4                       # gi scratch (f32)
        return resident + streams + scratch

    tb = 1
    for c in range(1, max_chunk + 1):
        if footprint(c) <= vmem_budget_bytes:
            tb = c
    return tb, footprint(tb)


def _gru_chunk_kernel(tb, bt, hp, T, mask_tail, unroll,
                      x_ref, wih_ref, whh_ref, gbias_ref, bhhn_ref, h0_ref,
                      out_ref, hn_ref, gi_scr):
    """One grid step = `tb` timesteps of the GRU for one batch tile.

    x_ref    : (tb, bt, I)    bf16 raw inputs for this chunk
    wih_ref  : (I,  3*hp)     bf16 input->hidden weights (r|z|n), gate-padded, resident
    whh_ref  : (hp, 3*hp)     bf16 hidden->hidden weights, gate-padded, resident
    gbias_ref: (1,  3*hp)     f32  b_ih + b_hh[r,z] (n part zeroed), resident
    bhhn_ref : (1,  hp)       f32  b_hh of the 'n' gate (scaled by r inside tanh)
    h0_ref   : (bt, hp)       f32  initial hidden state for this batch tile
    out_ref  : (tb, bt, hp)   f32  hidden states for this chunk (lane-dense, hp%128==0)
    hn_ref   : (bt, hp)       f32  final hidden state; doubles as the h carry
    gi_scr   : (tb, bt, 3*hp) f32  per-chunk input-projection scratch
    """
    t_blk = pl.program_id(1)

    @pl.when(t_blk == 0)
    def _():
        hn_ref[...] = h0_ref[...]           # (re)seed the carry for this batch tile

    wih = wih_ref[...]
    whh = whh_ref[...]
    # Hoist broadcasts out of the loops (JAX does not CSE broadcast_in_dim).
    gbias = jnp.broadcast_to(gbias_ref[...], (bt, 3 * hp))
    bhh_n = jnp.broadcast_to(bhhn_ref[...], (bt, hp))

    # ---- Fused input projection for the whole chunk (bf16 MXU, f32 acc).
    # Independent of h, so it stays off the serial per-timestep critical path
    # and eliminates the HBM write + re-read of a (T, B, 3*hp) gi tensor.
    def proj(i, carry):
        gi_scr[i] = (jnp.dot(x_ref[i], wih, preferred_element_type=jnp.float32)
                     + gbias)
        return carry

    lax.fori_loop(0, tb, proj, 0, unroll=True)

    # ---- Serial GRU recurrence (PyTorch nn.GRU gate order: r, z, n).
    # Gate elementwise math stays f32 (v5e has no bf16 VPU/EUP datapath);
    # only the matmul operands are bf16.
    def step(i, h):
        g = gi_scr[i]                                            # (bt, 3*hp) f32
        gh = jnp.dot(h.astype(jnp.bfloat16), whh,
                     preferred_element_type=jnp.float32)         # bf16 MXU, f32 acc
        r = jax.nn.sigmoid(g[:, 0 * hp:1 * hp] + gh[:, 0 * hp:1 * hp])
        z = jax.nn.sigmoid(g[:, 1 * hp:2 * hp] + gh[:, 1 * hp:2 * hp])
        n = jnp.tanh(g[:, 2 * hp:3 * hp] + r * (gh[:, 2 * hp:3 * hp] + bhh_n))
        h_new = (1.0 - z) * n + z * h
        if mask_tail:
            # Tail-padded timesteps (T % tb != 0): keep h (and hence h_n) exact.
            h_new = jnp.where(t_blk * tb + i < T, h_new, h)
        out_ref[i] = h_new.astype(out_ref.dtype)
        return h_new

    h_last = lax.fori_loop(0, tb, step, hn_ref[...], unroll=unroll)
    hn_ref[...] = h_last


def gru_forward_pallas(x, wih, whh, bih, bhh, h0, *,
                       max_time_chunk=16,
                       vmem_budget_bytes=48 * 1024 * 1024):
    """Single-layer unidirectional GRU over x.

    x   : (T, B, I) float32
    wih : (I, 3H)   whh : (H, 3H)   bih, bhh : (1, 3H)   h0 : (B, H)
    returns (output (T, B, H), h_n (1, B, H))  -- like torch.nn.GRU.
    """
    T, B, I = x.shape
    H = whh.shape[0]
    HP = _round_up(H, 128)          # gate-padded hidden width (lane-dense)
    f32, bf16 = jnp.float32, jnp.bfloat16

    bt = _pick_batch_tile(B)
    max_chunk = max(1, min(max_time_chunk, T))
    tb, est_vmem = _pick_time_chunk(bt, I, HP, vmem_budget_bytes, max_chunk)
    n_tc = -(-T // tb)
    T_pad = n_tc * tb
    mask_tail = (T_pad != T)

    # --- Gate-padded layout: each gate's column block starts at a 128-lane
    #     boundary (columns [g*HP, g*HP+H) hold gate g; the rest are zero).
    def pad_gate_cols(w, rows):
        out = jnp.zeros((rows, 3 * HP), f32)
        for g in range(3):
            out = out.at[:w.shape[0], g * HP:g * HP + H].set(
                w[:, g * H:(g + 1) * H].astype(f32))
        return out

    wih_p = pad_gate_cols(wih, I).astype(bf16)        # (I,  3*HP) bf16
    # Padded rows [H, HP) of W_hh are zero -> padded h lanes can never leak
    # into real lanes regardless of their values.
    whh_p = pad_gate_cols(whh, HP).astype(bf16)       # (HP, 3*HP) bf16
    bih_p = pad_gate_cols(bih, 1)                     # (1,  3*HP) f32
    bhh_p = pad_gate_cols(bhh, 1)                     # (1,  3*HP) f32
    bhh_n_p = bhh_p[:, 2 * HP:3 * HP]                              # (1, HP)
    gbias = bih_p + bhh_p.at[:, 2 * HP:3 * HP].set(0.0)            # fold b_ih + b_hh[r,z]

    h0_p = jnp.zeros((B, HP), f32).at[:, :H].set(h0.astype(f32))

    x_p = x.astype(bf16)
    if mask_tail:
        x_p = jnp.pad(x_p, ((0, T_pad - T), (0, 0), (0, 0)))

    kernel = functools.partial(_gru_chunk_kernel, tb, bt, HP, T, mask_tail,
                               min(tb, 8))

    vmem_limit = int(min(max(32 * 1024 * 1024, est_vmem * 3 // 2),
                         64 * 1024 * 1024))

    # TODO(synk): store the output stream in bf16 as well once downstream
    # consumers accept it (halves the dominant HBM writeback at production B).
    out_p, hn_p = pl.pallas_call(
        kernel,
        out_shape=(jax.ShapeDtypeStruct((T_pad, B, HP), f32),
                   jax.ShapeDtypeStruct((B, HP), f32)),
        grid_spec=pltpu.PrefetchScalarGridSpec(
            num_scalar_prefetch=0,
            grid=(B // bt, T_pad // tb),
            in_specs=[
                pl.BlockSpec((tb, bt, I), lambda b, t: (t, b, 0)),   # x chunk (bf16)
                pl.BlockSpec((I, 3 * HP), lambda b, t: (0, 0)),      # W_ih (resident)
                pl.BlockSpec((HP, 3 * HP), lambda b, t: (0, 0)),     # W_hh (resident)
                pl.BlockSpec((1, 3 * HP), lambda b, t: (0, 0)),      # folded bias
                pl.BlockSpec((1, HP), lambda b, t: (0, 0)),          # b_hh_n
                pl.BlockSpec((bt, HP), lambda b, t: (b, 0)),         # h0 (per batch tile)
            ],
            out_specs=(
                pl.BlockSpec((tb, bt, HP), lambda b, t: (t, b, 0)),  # outputs (lane-dense)
                pl.BlockSpec((bt, HP), lambda b, t: (b, 0)),         # h_n / carry (resident)
            ),
            scratch_shapes=[pltpu.VMEM((tb, bt, 3 * HP), f32)],       # gi scratch
        ),
        compiler_params=pltpu.CompilerParams(
            # Batch tiles are independent -> "parallel" (2 TCs on v7x);
            # time axis carries h -> "arbitrary".
            dimension_semantics=("parallel", "arbitrary"),
            vmem_limit_bytes=vmem_limit,
        ),
    )(x_p, wih_p, whh_p, gbias, bhh_n_p, h0_p)

    out = out_p[:T, :, :H]           # strip time + lane padding
    h_n = hn_p[None, :, :H]          # (1, B, H), num_layers * num_directions = 1
    return out, h_n


def base_rnn_forward(x, params, dropout_p=0.1, training=False):
    """BaseRNN-style forward: input_dropout(x) -> GRU (single layer, unidirectional)."""
    # Eval-mode nn.Dropout is the identity.
    # TODO(synk): train-mode dropout (pltpu.prng_random_bits mask) not wired in.
    # TODO(synk): LSTM cell / num_layers>1 / use_bidirection variants not implemented.
    del dropout_p, training
    return gru_forward_pallas(x, params["wih"], params["whh"],
                              params["bih"], params["bhh"], params["h0"])


def _gru_reference(x, wih, whh, bih, bhh, h0):
    """Pure-JAX f32 reference (lax.scan) for correctness checking."""
    H = whh.shape[0]

    def step(h, x_t):
        gi = jnp.dot(x_t, wih, precision=lax.Precision.HIGHEST) + bih
        gh = jnp.dot(h, whh, precision=lax.Precision.HIGHEST) + bhh
        r = jax.nn.sigmoid(gi[:, :H] + gh[:, :H])
        z = jax.nn.sigmoid(gi[:, H:2 * H] + gh[:, H:2 * H])
        n = jnp.tanh(gi[:, 2 * H:] + r * gh[:, 2 * H:])
        h_new = (1.0 - z) * n + z * h
        return h_new, h_new

    _, ys = jax.lax.scan(step, h0, x)
    return ys


if __name__ == "__main__":
    # Small config consistent with BaseRNN:
    #   hidden_size=32, num_layers=1, cell_type='gru', use_bidirection=False,
    #   dropout=0.1 (identity in eval), max_len >= T.
    T, B, I, H = 8, 8, 32, 32

    key = jax.random.PRNGKey(0)
    k_x, k_wih, k_whh, k_bih, k_bhh = jax.random.split(key, 5)

    scale = 1.0 / jnp.sqrt(H)
    x = jax.random.normal(k_x, (T, B, I), dtype=jnp.float32)
    params = {
        "wih": (jax.random.uniform(k_wih, (I, 3 * H), jnp.float32, -1.0, 1.0) * scale),
        "whh": (jax.random.uniform(k_whh, (H, 3 * H), jnp.float32, -1.0, 1.0) * scale),
        "bih": (jax.random.uniform(k_bih, (1, 3 * H), jnp.float32, -1.0, 1.0) * scale),
        "bhh": (jax.random.uniform(k_bhh, (1, 3 * H), jnp.float32, -1.0, 1.0) * scale),
        "h0": jnp.zeros((B, H), jnp.float32),
    }

    out, h_n = base_rnn_forward(x, params, dropout_p=0.1, training=False)
    out = jax.block_until_ready(out)
    h_n = jax.block_until_ready(h_n)

    ref = _gru_reference(x, params["wih"], params["whh"],
                         params["bih"], params["bhh"], params["h0"])
    assert out.shape == (T, B, H) and h_n.shape == (1, B, H)
    # bf16 MXU operands (f32 accumulation) -> compare to the f32 reference
    # with a correspondingly looser tolerance.
    assert jnp.allclose(out, ref, atol=4e-2, rtol=4e-2), "mismatch vs reference"
    assert jnp.allclose(h_n[0], ref[-1], atol=4e-2, rtol=4e-2), "h_n mismatch"

    print("KERNEL_OK")
</pallas_src>

<mosaic_0001>
module attributes {stable_mosaic.version = 11 : i64} {
  func.func @_gru_chunk_kernel(%arg0: i32, %arg1: i32, %arg2: memref<8x8x32xbf16, #tpu.memory_space<vmem>>, %arg3: memref<32x384xbf16, #tpu.memory_space<vmem>>, %arg4: memref<128x384xbf16, #tpu.memory_space<vmem>>, %arg5: memref<1x384xf32, #tpu.memory_space<vmem>>, %arg6: memref<1x128xf32, #tpu.memory_space<vmem>>, %arg7: memref<8x128xf32, #tpu.memory_space<vmem>>, %arg8: memref<8x8x128xf32, #tpu.memory_space<vmem>>, %arg9: memref<8x128xf32, #tpu.memory_space<vmem>>, %arg10: memref<8x8x384xf32, #tpu.memory_space<vmem>>) attributes {dimension_semantics = [#tpu.dimension_semantics<parallel>, #tpu.dimension_semantics<arbitrary>], iteration_bounds = array<i64: 1, 1>, scalar_prefetch = 0 : i64, scratch_operands = 1 : i64, tpu.core_type = #tpu.core_type<tc>, window_params = [{transform_indices = @transform_0, window_bounds = array<i64: 8, 8, 32>}, {pipeline_mode = #tpu.pipeline_mode<synchronous>, transform_indices = @transform_1, window_bounds = array<i64: 32, 384>}, {pipeline_mode = #tpu.pipeline_mode<synchronous>, transform_indices = @transform_2, window_bounds = array<i64: 128, 384>}, {pipeline_mode = #tpu.pipeline_mode<synchronous>, transform_indices = @transform_3, window_bounds = array<i64: 1, 384>}, {pipeline_mode = #tpu.pipeline_mode<synchronous>, transform_indices = @transform_4, window_bounds = array<i64: 1, 128>}, {transform_indices = @transform_5, window_bounds = array<i64: 8, 128>}, {transform_indices = @transform_6, window_bounds = array<i64: 8, 8, 128>}, {transform_indices = @transform_7, window_bounds = array<i64: 8, 128>}]} {
    %c0_i32 = arith.constant 0 : i32
    %0 = arith.cmpi eq, %arg1, %c0_i32 : i32
    %1 = arith.extui %0 : i1 to i32
    %c0_i32_0 = arith.constant 0 : i32
    %2 = arith.cmpi ne, %1, %c0_i32_0 : i32
    scf.if %2 {
      %c0_125 = arith.constant 0 : index
      %c0_126 = arith.constant 0 : index
      %373 = vector.load %arg7[%c0_125, %c0_126] : memref<8x128xf32, #tpu.memory_space<vmem>>, vector<8x128xf32>
      %c0_127 = arith.constant 0 : index
      %c0_128 = arith.constant 0 : index
      %374 = vector.load %arg9[%c0_127, %c0_128] : memref<8x128xf32, #tpu.memory_space<vmem>>, vector<8x128xf32>
      tpu.vector_store %arg9[%c0_127, %c0_128], %373 {strides = array<i32>} : memref<8x128xf32, #tpu.memory_space<vmem>>, vector<8x128xf32>,
    } else {
    }
    %c0 = arith.constant 0 : index
    %c0_1 = arith.constant 0 : index
    %3 = vector.load %arg3[%c0, %c0_1] : memref<32x384xbf16, #tpu.memory_space<vmem>>, vector<32x384xbf16>
    %c0_2 = arith.constant 0 : index
    %c0_3 = arith.constant 0 : index
    %4 = vector.load %arg4[%c0_2, %c0_3] : memref<128x384xbf16, #tpu.memory_space<vmem>>, vector<128x384xbf16>
    %c0_4 = arith.constant 0 : index
    %c0_5 = arith.constant 0 : index
    %5 = vector.load %arg5[%c0_4, %c0_5] : memref<1x384xf32, #tpu.memory_space<vmem>>, vector<1x384xf32>
    %6 = vector.shape_cast %5 : vector<1x384xf32> to vector<1x384xf32>
    %7 = vector.broadcast %6 : vector<1x384xf32> to vector<8x384xf32>
    %c0_6 = arith.constant 0 : index
    %c0_7 = arith.constant 0 : index
    %8 = vector.load %arg6[%c0_6, %c0_7] : memref<1x128xf32, #tpu.memory_space<vmem>>, vector<1x128xf32>
    %9 = vector.shape_cast %8 : vector<1x128xf32> to vector<1x128xf32>
    %10 = vector.broadcast %9 : vector<1x128xf32> to vector<8x128xf32>
    %c0_i32_8 = arith.constant 0 : i32
    %11 = arith.index_cast %c0_i32_8 : i32 to index
    %c0_9 = arith.constant 0 : index
    %c0_10 = arith.constant 0 : index
    %12 = vector.load %arg2[%11, %c0_9, %c0_10] : memref<8x8x32xbf16, #tpu.memory_space<vmem>>, vector<1x8x32xbf16>
    %13 = vector.shape_cast %12 : vector<1x8x32xbf16> to vector<8x32xbf16>
    %cst = arith.constant dense<0.000000e+00> : vector<8x384xf32>
    %14 = tpu.matmul %13, %3, %cst {dimension_numbers = #tpu.dot_dimension_numbers<[1], [0], [0], [1], [0, 0, 1, 1], [], []>} : vector<8x32xbf16>, vector<32x384xbf16>, vector<8x384xf32> -> vector<8x384xf32>
    %15 = arith.addf %14, %7 : vector<8x384xf32>
    %16 = arith.index_cast %c0_i32_8 : i32 to index
    %c0_11 = arith.constant 0 : index
    %c0_12 = arith.constant 0 : index
    %17 = vector.load %arg10[%16, %c0_11, %c0_12] : memref<8x8x384xf32, #tpu.memory_space<vmem>>, vector<1x8x384xf32>
    %18 = vector.shape_cast %17 : vector<1x8x384xf32> to vector<8x384xf32>
    %19 = vector.shape_cast %15 : vector<8x384xf32> to vector<1x8x384xf32>
    tpu.vector_store %arg10[%16, %c0_11, %c0_12], %19 {strides = array<i32>} : memref<8x8x384xf32, #tpu.memory_space<vmem>>, vector<1x8x384xf32>,
    %c1_i32 = arith.constant 1 : i32
    %20 = arith.index_cast %c1_i32 : i32 to index
    %c0_13 = arith.constant 0 : index
    %c0_14 = arith.constant 0 : index
    %21 = vector.load %arg2[%20, %c0_13, %c0_14] : memref<8x8x32xbf16, #tpu.memory_space<vmem>>, vector<1x8x32xbf16>
    %22 = vector.shape_cast %21 : vector<1x8x32xbf16> to vector<8x32xbf16>
    %cst_15 = arith.constant dense<0.000000e+00> : vector<8x384xf32>
    %23 = tpu.matmul %22, %3, %cst_15 {dimension_numbers = #tpu.dot_dimension_numbers<[1], [0], [0], [1], [0, 0, 1, 1], [], []>} : vector<8x32xbf16>, vector<32x384xbf16>, vector<8x384xf32> -> vector<8x384xf32>
    %24 = arith.addf %23, %7 : vector<8x384xf32>
    %25 = arith.index_cast %c1_i32 : i32 to index
    %c0_16 = arith.constant 0 : index
    %c0_17 = arith.constant 0 : index
    %26 = vector.load %arg10[%25, %c0_16, %c0_17] : memref<8x8x384xf32, #tpu.memory_space<vmem>>, vector<1x8x384xf32>
    %27 = vector.shape_cast %26 : vector<1x8x384xf32> to vector<8x384xf32>
    %28 = vector.shape_cast %24 : vector<8x384xf32> to vector<1x8x384xf32>
    tpu.vector_store %arg10[%25, %c0_16, %c0_17], %28 {strides = array<i32>} : memref<8x8x384xf32, #tpu.memory_space<vmem>>, vector<1x8x384xf32>,
    %c2_i32 = arith.constant 2 : i32
    %29 = arith.index_cast %c2_i32 : i32 to index
    %c0_18 = arith.constant 0 : index
    %c0_19 = arith.constant 0 : index
    %30 = vector.load %arg2[%29, %c0_18, %c0_19] : memref<8x8x32xbf16, #tpu.memory_space<vmem>>, vector<1x8x32xbf16>
    %31 = vector.shape_cast %30 : vector<1x8x32xbf16> to vector<8x32xbf16>
    %cst_20 = arith.constant dense<0.000000e+00> : vector<8x384xf32>
    %32 = tpu.matmul %31, %3, %cst_20 {dimension_numbers = #tpu.dot_dimension_numbers<[1], [0], [0], [1], [0, 0, 1, 1], [], []>} : vector<8x32xbf16>, vector<32x384xbf16>, vector<8x384xf32> -> vector<8x384xf32>
    %33 = arith.addf %32, %7 : vector<8x384xf32>
    %34 = arith.index_cast %c2_i32 : i32 to index
    %c0_21 = arith.constant 0 : index
    %c0_22 = arith.constant 0 : index
    %35 = vector.load %arg10[%34, %c0_21, %c0_22] : memref<8x8x384xf32, #tpu.memory_space<vmem>>, vector<1x8x384xf32>
    %36 = vector.shape_cast %35 : vector<1x8x384xf32> to vector<8x384xf32>
    %37 = vector.shape_cast %33 : vector<8x384xf32> to vector<1x8x384xf32>
    tpu.vector_store %arg10[%34, %c0_21, %c0_22], %37 {strides = array<i32>} : memref<8x8x384xf32, #tpu.memory_space<vmem>>, vector<1x8x384xf32>,
    %c3_i32 = arith.constant 3 : i32
    %38 = arith.index_cast %c3_i32 : i32 to index
    %c0_23 = arith.constant 0 : index
    %c0_24 = arith.constant 0 : index
    %39 = vector.load %arg2[%38, %c0_23, %c0_24] : memref<8x8x32xbf16, #tpu.memory_space<vmem>>, vector<1x8x32xbf16>
    %40 = vector.shape_cast %39 : vector<1x8x32xbf16> to vector<8x32xbf16>
    %cst_25 = arith.constant dense<0.000000e+00> : vector<8x384xf32>
    %41 = tpu.matmul %40, %3, %cst_25 {dimension_numbers = #tpu.dot_dimension_numbers<[1], [0], [0], [1], [0, 0, 1, 1], [], []>} : vector<8x32xbf16>, vector<32x384xbf16>, vector<8x384xf32> -> vector<8x384xf32>
    %42 = arith.addf %41, %7 : vector<8x384xf32>
    %43 = arith.index_cast %c3_i32 : i32 to index
    %c0_26 = arith.constant 0 : index
    %c0_27 = arith.constant 0 : index
    %44 = vector.load %arg10[%43, %c0_26, %c0_27] : memref<8x8x384xf32, #tpu.memory_space<vmem>>, vector<1x8x384xf32>
    %45 = vector.shape_cast %44 : vector<1x8x384xf32> to vector<8x384xf32>
    %46 = vector.shape_cast %42 : vector<8x384xf32> to vector<1x8x384xf32>
    tpu.vector_store %arg10[%43, %c0_26, %c0_27], %46 {strides = array<i32>} : memref<8x8x384xf32, #tpu.memory_space<vmem>>, vector<1x8x384xf32>,
    %c4_i32 = arith.constant 4 : i32
    %47 = arith.index_cast %c4_i32 : i32 to index
    %c0_28 = arith.constant 0 : index
    %c0_29 = arith.constant 0 : index
    %48 = vector.load %arg2[%47, %c0_28, %c0_29] : memref<8x8x32xbf16, #tpu.memory_space<vmem>>, vector<1x8x32xbf16>
    %49 = vector.shape_cast %48 : vector<1x8x32xbf16> to vector<8x32xbf16>
    %cst_30 = arith.constant dense<0.000000e+00> : vector<8x384xf32>
    %50 = tpu.matmul %49, %3, %cst_30 {dimension_numbers = #tpu.dot_dimension_numbers<[1], [0], [0], [1], [0, 0, 1, 1], [], []>} : vector<8x32xbf16>, vector<32x384xbf16>, vector<8x384xf32> -> vector<8x384xf32>
    %51 = arith.addf %50, %7 : vector<8x384xf32>
    %52 = arith.index_cast %c4_i32 : i32 to index
    %c0_31 = arith.constant 0 : index
    %c0_32 = arith.constant 0 : index
    %53 = vector.load %arg10[%52, %c0_31, %c0_32] : memref<8x8x384xf32, #tpu.memory_space<vmem>>, vector<1x8x384xf32>
    %54 = vector.shape_cast %53 : vector<1x8x384xf32> to vector<8x384xf32>
    %55 = vector.shape_cast %51 : vector<8x384xf32> to vector<1x8x384xf32>
    tpu.vector_store %arg10[%52, %c0_31, %c0_32], %55 {strides = array<i32>} : memref<8x8x384xf32, #tpu.memory_space<vmem>>, vector<1x8x384xf32>,
    %c5_i32 = arith.constant 5 : i32
    %56 = arith.index_cast %c5_i32 : i32 to index
    %c0_33 = arith.constant 0 : index
    %c0_34 = arith.constant 0 : index
    %57 = vector.load %arg2[%56, %c0_33, %c0_34] : memref<8x8x32xbf16, #tpu.memory_space<vmem>>, vector<1x8x32xbf16>
    %58 = vector.shape_cast %57 : vector<1x8x32xbf16> to vector<8x32xbf16>
    %cst_35 = arith.constant dense<0.000000e+00> : vector<8x384xf32>
    %59 = tpu.matmul %58, %3, %cst_35 {dimension_numbers = #tpu.dot_dimension_numbers<[1], [0], [0], [1], [0, 0, 1, 1], [], []>} : vector<8x32xbf16>, vector<32x384xbf16>, vector<8x384xf32> -> vector<8x384xf32>
    %60 = arith.addf %59, %7 : vector<8x384xf32>
    %61 = arith.index_cast %c5_i32 : i32 to index
    %c0_36 = arith.constant 0 : index
    %c0_37 = arith.constant 0 : index
    %62 = vector.load %arg10[%61, %c0_36, %c0_37] : memref<8x8x384xf32, #tpu.memory_space<vmem>>, vector<1x8x384xf32>
    %63 = vector.shape_cast %62 : vector<1x8x384xf32> to vector<8x384xf32>
    %64 = vector.shape_cast %60 : vector<8x384xf32> to vector<1x8x384xf32>
    tpu.vector_store %arg10[%61, %c0_36, %c0_37], %64 {strides = array<i32>} : memref<8x8x384xf32, #tpu.memory_space<vmem>>, vector<1x8x384xf32>,
    %c6_i32 = arith.constant 6 : i32
    %65 = arith.index_cast %c6_i32 : i32 to index
    %c0_38 = arith.constant 0 : index
    %c0_39 = arith.constant 0 : index
    %66 = vector.load %arg2[%65, %c0_38, %c0_39] : memref<8x8x32xbf16, #tpu.memory_space<vmem>>, vector<1x8x32xbf16>
    %67 = vector.shape_cast %66 : vector<1x8x32xbf16> to vector<8x32xbf16>
    %cst_40 = arith.constant dense<0.000000e+00> : vector<8x384xf32>
    %68 = tpu.matmul %67, %3, %cst_40 {dimension_numbers = #tpu.dot_dimension_numbers<[1], [0], [0], [1], [0, 0, 1, 1], [], []>} : vector<8x32xbf16>, vector<32x384xbf16>, vector<8x384xf32> -> vector<8x384xf32>
    %69 = arith.addf %68, %7 : vector<8x384xf32>
    %70 = arith.index_cast %c6_i32 : i32 to index
    %c0_41 = arith.constant 0 : index
    %c0_42 = arith.constant 0 : index
    %71 = vector.load %arg10[%70, %c0_41, %c0_42] : memref<8x8x384xf32, #tpu.memory_space<vmem>>, vector<1x8x384xf32>
    %72 = vector.shape_cast %71 : vector<1x8x384xf32> to vector<8x384xf32>
    %73 = vector.shape_cast %69 : vector<8x384xf32> to vector<1x8x384xf32>
    tpu.vector_store %arg10[%70, %c0_41, %c0_42], %73 {strides = array<i32>} : memref<8x8x384xf32, #tpu.memory_space<vmem>>, vector<1x8x384xf32>,
    %c7_i32 = arith.constant 7 : i32
    %74 = arith.index_cast %c7_i32 : i32 to index
    %c0_43 = arith.constant 0 : index
    %c0_44 = arith.constant 0 : index
    %75 = vector.load %arg2[%74, %c0_43, %c0_44] : memref<8x8x32xbf16, #tpu.memory_space<vmem>>, vector<1x8x32xbf16>
    %76 = vector.shape_cast %75 : vector<1x8x32xbf16> to vector<8x32xbf16>
    %cst_45 = arith.constant dense<0.000000e+00> : vector<8x384xf32>
    %77 = tpu.matmul %76, %3, %cst_45 {dimension_numbers = #tpu.dot_dimension_numbers<[1], [0], [0], [1], [0, 0, 1, 1], [], []>} : vector<8x32xbf16>, vector<32x384xbf16>, vector<8x384xf32> -> vector<8x384xf32>
    %78 = arith.addf %77, %7 : vector<8x384xf32>
    %79 = arith.index_cast %c7_i32 : i32 to index
    %c0_46 = arith.constant 0 : index
    %c0_47 = arith.constant 0 : index
    %80 = vector.load %arg10[%79, %c0_46, %c0_47] : memref<8x8x384xf32, #tpu.memory_space<vmem>>, vector<1x8x384xf32>
    %81 = vector.shape_cast %80 : vector<1x8x384xf32> to vector<8x384xf32>
    %82 = vector.shape_cast %78 : vector<8x384xf32> to vector<1x8x384xf32>
    tpu.vector_store %arg10[%79, %c0_46, %c0_47], %82 {strides = array<i32>} : memref<8x8x384xf32, #tpu.memory_space<vmem>>, vector<1x8x384xf32>,
    %c8_i32 = arith.constant 8 : i32
    %c0_48 = arith.constant 0 : index
    %c0_49 = arith.constant 0 : index
    %83 = vector.load %arg9[%c0_48, %c0_49] : memref<8x128xf32, #tpu.memory_space<vmem>>, vector<8x128xf32>
    %c0_i32_50 = arith.constant 0 : i32
    %84 = arith.index_cast %c0_i32_50 : i32 to index
    %c0_51 = arith.constant 0 : index
    %c0_52 = arith.constant 0 : index
    %85 = vector.load %arg10[%84, %c0_51, %c0_52] : memref<8x8x384xf32, #tpu.memory_space<vmem>>, vector<1x8x384xf32>
    %86 = vector.shape_cast %85 : vector<1x8x384xf32> to vector<8x384xf32>
    %87 = arith.truncf %83 : vector<8x128xf32> to vector<8x128xbf16>
    %cst_53 = arith.constant dense<0.000000e+00> : vector<8x384xf32>
    %88 = tpu.matmul %87, %4, %cst_53 {dimension_numbers = #tpu.dot_dimension_numbers<[1], [0], [0], [1], [0, 0, 1, 1], [], []>} : vector<8x128xbf16>, vector<128x384xbf16>, vector<8x384xf32> -> vector<8x384xf32>
    %89 = vector.extract_strided_slice %86 {offsets = [0, 0], sizes = [8, 128], strides = [1, 1]} : vector<8x384xf32> to vector<8x128xf32>
    %90 = vector.extract_strided_slice %88 {offsets = [0, 0], sizes = [8, 128], strides = [1, 1]} : vector<8x384xf32> to vector<8x128xf32>
    %91 = arith.addf %89, %90 : vector<8x128xf32>
    %92 = arith.negf %91 : vector<8x128xf32>
    %93 = math.exp %92 : vector<8x128xf32>
    %cst_54 = arith.constant 1.000000e+00 : f32
    %94 = vector.broadcast %cst_54 : f32 to vector<8x128xf32>
    %95 = arith.addf %94, %93 : vector<8x128xf32>
    %96 = arith.divf %94, %95 : vector<8x128xf32>
    %97 = vector.extract_strided_slice %86 {offsets = [0, 128], sizes = [8, 128], strides = [1, 1]} : vector<8x384xf32> to vector<8x128xf32>
    %98 = vector.extract_strided_slice %88 {offsets = [0, 128], sizes = [8, 128], strides = [1, 1]} : vector<8x384xf32> to vector<8x128xf32>
    %99 = arith.addf %97, %98 : vector<8x128xf32>
    %100 = arith.negf %99 : vector<8x128xf32>
    %101 = math.exp %100 : vector<8x128xf32>
    %cst_55 = arith.constant 1.000000e+00 : f32
    %102 = vector.broadcast %cst_55 : f32 to vector<8x128xf32>
    %103 = arith.addf %102, %101 : vector<8x128xf32>
    %104 = arith.divf %102, %103 : vector<8x128xf32>
    %105 = vector.extract_strided_slice %86 {offsets = [0, 256], sizes = [8, 128], strides = [1, 1]} : vector<8x384xf32> to vector<8x128xf32>
    %106 = vector.extract_strided_slice %88 {offsets = [0, 256], sizes = [8, 128], strides = [1, 1]} : vector<8x384xf32> to vector<8x128xf32>
    %107 = arith.addf %106, %10 : vector<8x128xf32>
    %108 = arith.mulf %96, %107 : vector<8x128xf32>
    %109 = arith.addf %105, %108 : vector<8x128xf32>
    %110 = math.tanh %109 : vector<8x128xf32>
    %cst_56 = arith.constant 1.000000e+00 : f32
    %111 = vector.broadcast %cst_56 : f32 to vector<8x128xf32>
    %112 = arith.subf %111, %104 : vector<8x128xf32>
    %113 = arith.mulf %112, %110 : vector<8x128xf32>
    %114 = arith.mulf %104, %83 : vector<8x128xf32>
    %115 = arith.addf %113, %114 : vector<8x128xf32>
    %116 = arith.index_cast %c0_i32_50 : i32 to index
    %c0_57 = arith.constant 0 : index
    %c0_58 = arith.constant 0 : index
    %117 = vector.load %arg8[%116, %c0_57, %c0_58] : memref<8x8x128xf32, #tpu.memory_space<vmem>>, vector<1x8x128xf32>
    %118 = vector.shape_cast %117 : vector<1x8x128xf32> to vector<8x128xf32>
    %119 = vector.shape_cast %115 : vector<8x128xf32> to vector<1x8x128xf32>
    tpu.vector_store %arg8[%116, %c0_57, %c0_58], %119 {strides = array<i32>} : memref<8x8x128xf32, #tpu.memory_space<vmem>>, vector<1x8x128xf32>,
    %c1_i32_59 = arith.constant 1 : i32
    %120 = arith.index_cast %c1_i32_59 : i32 to index
    %c0_60 = arith.constant 0 : index
    %c0_61 = arith.constant 0 : index
    %121 = vector.load %arg10[%120, %c0_60, %c0_61] : memref<8x8x384xf32, #tpu.memory_space<vmem>>, vector<1x8x384xf32>
    %122 = vector.shape_cast %121 : vector<1x8x384xf32> to vector<8x384xf32>
    %123 = arith.truncf %115 : vector<8x128xf32> to vector<8x128xbf16>
    %cst_62 = arith.constant dense<0.000000e+00> : vector<8x384xf32>
    %124 = tpu.matmul %123, %4, %cst_62 {dimension_numbers = #tpu.dot_dimension_numbers<[1], [0], [0], [1], [0, 0, 1, 1], [], []>} : vector<8x128xbf16>, vector<128x384xbf16>, vector<8x384xf32> -> vector<8x384xf32>
    %125 = vector.extract_strided_slice %122 {offsets = [0, 0], sizes = [8, 128], strides = [1, 1]} : vector<8x384xf32> to vector<8x128xf32>
    %126 = vector.extract_strided_slice %124 {offsets = [0, 0], sizes = [8, 128], strides = [1, 1]} : vector<8x384xf32> to vector<8x128xf32>
    %127 = arith.addf %125, %126 : vector<8x128xf32>
    %128 = arith.negf %127 : vector<8x128xf32>
    %129 = math.exp %128 : vector<8x128xf32>
    %cst_63 = arith.constant 1.000000e+00 : f32
    %130 = vector.broadcast %cst_63 : f32 to vector<8x128xf32>
    %131 = arith.addf %130, %129 : vector<8x128xf32>
    %132 = arith.divf %130, %131 : vector<8x128xf32>
    %133 = vector.extract_strided_slice %122 {offsets = [0, 128], sizes = [8, 128], strides = [1, 1]} : vector<8x384xf32> to vector<8x128xf32>
    %134 = vector.extract_strided_slice %124 {offsets = [0, 128], sizes = [8, 128], strides = [1, 1]} : vector<8x384xf32> to vector<8x128xf32>
    %135 = arith.addf %133, %134 : vector<8x128xf32>
    %136 = arith.negf %135 : vector<8x128xf32>
    %137 = math.exp %136 : vector<8x128xf32>
    %cst_64 = arith.constant 1.000000e+00 : f32
    %138 = vector.broadcast %cst_64 : f32 to vector<8x128xf32>
    %139 = arith.addf %138, %137 : vector<8x128xf32>
    %140 = arith.divf %138, %139 : vector<8x128xf32>
    %141 = vector.extract_strided_slice %122 {offsets = [0, 256], sizes = [8, 128], strides = [1, 1]} : vector<8x384xf32> to vector<8x128xf32>
    %142 = vector.extract_strided_slice %124 {offsets = [0, 256], sizes = [8, 128], strides = [1, 1]} : vector<8x384xf32> to vector<8x128xf32>
    %143 = arith.addf %142, %10 : vector<8x128xf32>
    %144 = arith.mulf %132, %143 : vector<8x128xf32>
    %145 = arith.addf %141, %144 : vector<8x128xf32>
    %146 = math.tanh %145 : vector<8x128xf32>
    %cst_65 = arith.constant 1.000000e+00 : f32
    %147 = vector.broadcast %cst_65 : f32 to vector<8x128xf32>
    %148 = arith.subf %147, %140 : vector<8x128xf32>
    %149 = arith.mulf %148, %146 : vector<8x128xf32>
    %150 = arith.mulf %140, %115 : vector<8x128xf32>
    %151 = arith.addf %149, %150 : vector<8x128xf32>
    %152 = arith.index_cast %c1_i32_59 : i32 to index
    %c0_66 = arith.constant 0 : index
    %c0_67 = arith.constant 0 : index
    %153 = vector.load %arg8[%152, %c0_66, %c0_67] : memref<8x8x128xf32, #tpu.memory_space<vmem>>, vector<1x8x128xf32>
    %154 = vector.shape_cast %153 : vector<1x8x128xf32> to vector<8x128xf32>
    %155 = vector.shape_cast %151 : vector<8x128xf32> to vector<1x8x128xf32>
    tpu.vector_store %arg8[%152, %c0_66, %c0_67], %155 {strides = array<i32>} : memref<8x8x128xf32, #tpu.memory_space<vmem>>, vector<1x8x128xf32>,
    %c2_i32_68 = arith.constant 2 : i32
    %156 = arith.index_cast %c2_i32_68 : i32 to index
    %c0_69 = arith.constant 0 : index
    %c0_70 = arith.constant 0 : index
    %157 = vector.load %arg10[%156, %c0_69, %c0_70] : memref<8x8x384xf32, #tpu.memory_space<vmem>>, vector<1x8x384xf32>
    %158 = vector.shape_cast %157 : vector<1x8x384xf32> to vector<8x384xf32>
    %159 = arith.truncf %151 : vector<8x128xf32> to vector<8x128xbf16>
    %cst_71 = arith.constant dense<0.000000e+00> : vector<8x384xf32>
    %160 = tpu.matmul %159, %4, %cst_71 {dimension_numbers = #tpu.dot_dimension_numbers<[1], [0], [0], [1], [0, 0, 1, 1], [], []>} : vector<8x128xbf16>, vector<128x384xbf16>, vector<8x384xf32> -> vector<8x384xf32>
    %161 = vector.extract_strided_slice %158 {offsets = [0, 0], sizes = [8, 128], strides = [1, 1]} : vector<8x384xf32> to vector<8x128xf32>
    %162 = vector.extract_strided_slice %160 {offsets = [0, 0], sizes = [8, 128], strides = [1, 1]} : vector<8x384xf32> to vector<8x128xf32>
    %163 = arith.addf %161, %162 : vector<8x128xf32>
    %164 = arith.negf %163 : vector<8x128xf32>
    %165 = math.exp %164 : vector<8x128xf32>
    %cst_72 = arith.constant 1.000000e+00 : f32
    %166 = vector.broadcast %cst_72 : f32 to vector<8x128xf32>
    %167 = arith.addf %166, %165 : vector<8x128xf32>
    %168 = arith.divf %166, %167 : vector<8x128xf32>
    %169 = vector.extract_strided_slice %158 {offsets = [0, 128], sizes = [8, 128], strides = [1, 1]} : vector<8x384xf32> to vector<8x128xf32>
    %170 = vector.extract_strided_slice %160 {offsets = [0, 128], sizes = [8, 128], strides = [1, 1]} : vector<8x384xf32> to vector<8x128xf32>
    %171 = arith.addf %169, %170 : vector<8x128xf32>
    %172 = arith.negf %171 : vector<8x128xf32>
    %173 = math.exp %172 : vector<8x128xf32>
    %cst_73 = arith.constant 1.000000e+00 : f32
    %174 = vector.broadcast %cst_73 : f32 to vector<8x128xf32>
    %175 = arith.addf %174, %173 : vector<8x128xf32>
    %176 = arith.divf %174, %175 : vector<8x128xf32>
    %177 = vector.extract_strided_slice %158 {offsets = [0, 256], sizes = [8, 128], strides = [1, 1]} : vector<8x384xf32> to vector<8x128xf32>
    %178 = vector.extract_strided_slice %160 {offsets = [0, 256], sizes = [8, 128], strides = [1, 1]} : vector<8x384xf32> to vector<8x128xf32>
    %179 = arith.addf %178, %10 : vector<8x128xf32>
    %180 = arith.mulf %168, %179 : vector<8x128xf32>
    %181 = arith.addf %177, %180 : vector<8x128xf32>
    %182 = math.tanh %181 : vector<8x128xf32>
    %cst_74 = arith.constant 1.000000e+00 : f32
    %183 = vector.broadcast %cst_74 : f32 to vector<8x128xf32>
    %184 = arith.subf %183, %176 : vector<8x128xf32>
    %185 = arith.mulf %184, %182 : vector<8x128xf32>
    %186 = arith.mulf %176, %151 : vector<8x128xf32>
    %187 = arith.addf %185, %186 : vector<8x128xf32>
    %188 = arith.index_cast %c2_i32_68 : i32 to index
    %c0_75 = arith.constant 0 : index
    %c0_76 = arith.constant 0 : index
    %189 = vector.load %arg8[%188, %c0_75, %c0_76] : memref<8x8x128xf32, #tpu.memory_space<vmem>>, vector<1x8x128xf32>
    %190 = vector.shape_cast %189 : vector<1x8x128xf32> to vector<8x128xf32>
    %191 = vector.shape_cast %187 : vector<8x128xf32> to vector<1x8x128xf32>
    tpu.vector_store %arg8[%188, %c0_75, %c0_76], %191 {strides = array<i32>} : memref<8x8x128xf32, #tpu.memory_space<vmem>>, vector<1x8x128xf32>,
    %c3_i32_77 = arith.constant 3 : i32
    %192 = arith.index_cast %c3_i32_77 : i32 to index
    %c0_78 = arith.constant 0 : index
    %c0_79 = arith.constant 0 : index
    %193 = vector.load %arg10[%192, %c0_78, %c0_79] : memref<8x8x384xf32, #tpu.memory_space<vmem>>, vector<1x8x384xf32>
    %194 = vector.shape_cast %193 : vector<1x8x384xf32> to vector<8x384xf32>
    %195 = arith.truncf %187 : vector<8x128xf32> to vector<8x128xbf16>
    %cst_80 = arith.constant dense<0.000000e+00> : vector<8x384xf32>
    %196 = tpu.matmul %195, %4, %cst_80 {dimension_numbers = #tpu.dot_dimension_numbers<[1], [0], [0], [1], [0, 0, 1, 1], [], []>} : vector<8x128xbf16>, vector<128x384xbf16>, vector<8x384xf32> -> vector<8x384xf32>
    %197 = vector.extract_strided_slice %194 {offsets = [0, 0], sizes = [8, 128], strides = [1, 1]} : vector<8x384xf32> to vector<8x128xf32>
    %198 = vector.extract_strided_slice %196 {offsets = [0, 0], sizes = [8, 128], strides = [1, 1]} : vector<8x384xf32> to vector<8x128xf32>
    %199 = arith.addf %197, %198 : vector<8x128xf32>
    %200 = arith.negf %199 : vector<8x128xf32>
    %201 = math.exp %200 : vector<8x128xf32>
    %cst_81 = arith.constant 1.000000e+00 : f32
    %202 = vector.broadcast %cst_81 : f32 to vector<8x128xf32>
    %203 = arith.addf %202, %201 : vector<8x128xf32>
    %204 = arith.divf %202, %203 : vector<8x128xf32>
    %205 = vector.extract_strided_slice %194 {offsets = [0, 128], sizes = [8, 128], strides = [1, 1]} : vector<8x384xf32> to vector<8x128xf32>
    %206 = vector.extract_strided_slice %196 {offsets = [0, 128], sizes = [8, 128], strides = [1, 1]} : vector<8x384xf32> to vector<8x128xf32>
    %207 = arith.addf %205, %206 : vector<8x128xf32>
    %208 = arith.negf %207 : vector<8x128xf32>
    %209 = math.exp %208 : vector<8x128xf32>
    %cst_82 = arith.constant 1.000000e+00 : f32
    %210 = vector.broadcast %cst_82 : f32 to vector<8x128xf32>
    %211 = arith.addf %210, %209 : vector<8x128xf32>
    %212 = arith.divf %210, %211 : vector<8x128xf32>
    %213 = vector.extract_strided_slice %194 {offsets = [0, 256], sizes = [8, 128], strides = [1, 1]} : vector<8x384xf32> to vector<8x128xf32>
    %214 = vector.extract_strided_slice %196 {offsets = [0, 256], sizes = [8, 128], strides = [1, 1]} : vector<8x384xf32> to vector<8x128xf32>
    %215 = arith.addf %214, %10 : vector<8x128xf32>
    %216 = arith.mulf %204, %215 : vector<8x128xf32>
    %217 = arith.addf %213, %216 : vector<8x128xf32>
    %218 = math.tanh %217 : vector<8x128xf32>
    %cst_83 = arith.constant 1.000000e+00 : f32
    %219 = vector.broadcast %cst_83 : f32 to vector<8x128xf32>
    %220 = arith.subf %219, %212 : vector<8x128xf32>
    %221 = arith.mulf %220, %218 : vector<8x128xf32>
    %222 = arith.mulf %212, %187 : vector<8x128xf32>
    %223 = arith.addf %221, %222 : vector<8x128xf32>
    %224 = arith.index_cast %c3_i32_77 : i32 to index
    %c0_84 = arith.constant 0 : index
    %c0_85 = arith.constant 0 : index
    %225 = vector.load %arg8[%224, %c0_84, %c0_85] : memref<8x8x128xf32, #tpu.memory_space<vmem>>, vector<1x8x128xf32>
    %226 = vector.shape_cast %225 : vector<1x8x128xf32> to vector<8x128xf32>
    %227 = vector.shape_cast %223 : vector<8x128xf32> to vector<1x8x128xf32>
    tpu.vector_store %arg8[%224, %c0_84, %c0_85], %227 {strides = array<i32>} : memref<8x8x128xf32, #tpu.memory_space<vmem>>, vector<1x8x128xf32>,
    %c4_i32_86 = arith.constant 4 : i32
    %228 = arith.index_cast %c4_i32_86 : i32 to index
    %c0_87 = arith.constant 0 : index
    %c0_88 = arith.constant 0 : index
    %229 = vector.load %arg10[%228, %c0_87, %c0_88] : memref<8x8x384xf32, #tpu.memory_space<vmem>>, vector<1x8x384xf32>
    %230 = vector.shape_cast %229 : vector<1x8x384xf32> to vector<8x384xf32>
    %231 = arith.truncf %223 : vector<8x128xf32> to vector<8x128xbf16>
    %cst_89 = arith.constant dense<0.000000e+00> : vector<8x384xf32>
    %232 = tpu.matmul %231, %4, %cst_89 {dimension_numbers = #tpu.dot_dimension_numbers<[1], [0], [0], [1], [0, 0, 1, 1], [], []>} : vector<8x128xbf16>, vector<128x384xbf16>, vector<8x384xf32> -> vector<8x384xf32>
    %233 = vector.extract_strided_slice %230 {offsets = [0, 0], sizes = [8, 128], strides = [1, 1]} : vector<8x384xf32> to vector<8x128xf32>
    %234 = vector.extract_strided_slice %232 {offsets = [0, 0], sizes = [8, 128], strides = [1, 1]} : vector<8x384xf32> to vector<8x128xf32>
    %235 = arith.addf %233, %234 : vector<8x128xf32>
    %236 = arith.negf %235 : vector<8x128xf32>
    %237 = math.exp %236 : vector<8x128xf32>
    %cst_90 = arith.constant 1.000000e+00 : f32
    %238 = vector.broadcast %cst_90 : f32 to vector<8x128xf32>
    %239 = arith.addf %238, %237 : vector<8x128xf32>
    %240 = arith.divf %238, %239 : vector<8x128xf32>
    %241 = vector.extract_strided_slice %230 {offsets = [0, 128], sizes = [8, 128], strides = [1, 1]} : vector<8x384xf32> to vector<8x128xf32>
    %242 = vector.extract_strided_slice %232 {offsets = [0, 128], sizes = [8, 128], strides = [1, 1]} : vector<8x384xf32> to vector<8x128xf32>
    %243 = arith.addf %241, %242 : vector<8x128xf32>
    %244 = arith.negf %243 : vector<8x128xf32>
    %245 = math.exp %244 : vector<8x128xf32>
    %cst_91 = arith.constant 1.000000e+00 : f32
    %246 = vector.broadcast %cst_91 : f32 to vector<8x128xf32>
    %247 = arith.addf %246, %245 : vector<8x128xf32>
    %248 = arith.divf %246, %247 : vector<8x128xf32>
    %249 = vector.extract_strided_slice %230 {offsets = [0, 256], sizes = [8, 128], strides = [1, 1]} : vector<8x384xf32> to vector<8x128xf32>
    %250 = vector.extract_strided_slice %232 {offsets = [0, 256], sizes = [8, 128], strides = [1, 1]} : vector<8x384xf32> to vector<8x128xf32>
    %251 = arith.addf %250, %10 : vector<8x128xf32>
    %252 = arith.mulf %240, %251 : vector<8x128xf32>
    %253 = arith.addf %249, %252 : vector<8x128xf32>
    %254 = math.tanh %253 : vector<8x128xf32>
    %cst_92 = arith.constant 1.000000e+00 : f32
    %255 = vector.broadcast %cst_92 : f32 to vector<8x128xf32>
    %256 = arith.subf %255, %248 : vector<8x128xf32>
    %257 = arith.mulf %256, %254 : vector<8x128xf32>
    %258 = arith.mulf %248, %223 : vector<8x128xf32>
    %259 = arith.addf %257, %258 : vector<8x128xf32>
    %260 = arith.index_cast %c4_i32_86 : i32 to index
    %c0_93 = arith.constant 0 : index
    %c0_94 = arith.constant 0 : index
    %261 = vector.load %arg8[%260, %c0_93, %c0_94] : memref<8x8x128xf32, #tpu.memory_space<vmem>>, vector<1x8x128xf32>
    %262 = vector.shape_cast %261 : vector<1x8x128xf32> to vector<8x128xf32>
    %263 = vector.shape_cast %259 : vector<8x128xf32> to vector<1x8x128xf32>
    tpu.vector_store %arg8[%260, %c0_93, %c0_94], %263 {strides = array<i32>} : memref<8x8x128xf32, #tpu.memory_space<vmem>>, vector<1x8x128xf32>,
    %c5_i32_95 = arith.constant 5 : i32
    %264 = arith.index_cast %c5_i32_95 : i32 to index
    %c0_96 = arith.constant 0 : index
    %c0_97 = arith.constant 0 : index
    %265 = vector.load %arg10[%264, %c0_96, %c0_97] : memref<8x8x384xf32, #tpu.memory_space<vmem>>, vector<1x8x384xf32>
    %266 = vector.shape_cast %265 : vector<1x8x384xf32> to vector<8x384xf32>
    %267 = arith.truncf %259 : vector<8x128xf32> to vector<8x128xbf16>
    %cst_98 = arith.constant dense<0.000000e+00> : vector<8x384xf32>
    %268 = tpu.matmul %267, %4, %cst_98 {dimension_numbers = #tpu.dot_dimension_numbers<[1], [0], [0], [1], [0, 0, 1, 1], [], []>} : vector<8x128xbf16>, vector<128x384xbf16>, vector<8x384xf32> -> vector<8x384xf32>
    %269 = vector.extract_strided_slice %266 {offsets = [0, 0], sizes = [8, 128], strides = [1, 1]} : vector<8x384xf32> to vector<8x128xf32>
    %270 = vector.extract_strided_slice %268 {offsets = [0, 0], sizes = [8, 128], strides = [1, 1]} : vector<8x384xf32> to vector<8x128xf32>
    %271 = arith.addf %269, %270 : vector<8x128xf32>
    %272 = arith.negf %271 : vector<8x128xf32>
    %273 = math.exp %272 : vector<8x128xf32>
    %cst_99 = arith.constant 1.000000e+00 : f32
    %274 = vector.broadcast %cst_99 : f32 to vector<8x128xf32>
    %275 = arith.addf %274, %273 : vector<8x128xf32>
    %276 = arith.divf %274, %275 : vector<8x128xf32>
    %277 = vector.extract_strided_slice %266 {offsets = [0, 128], sizes = [8, 128], strides = [1, 1]} : vector<8x384xf32> to vector<8x128xf32>
    %278 = vector.extract_strided_slice %268 {offsets = [0, 128], sizes = [8, 128], strides = [1, 1]} : vector<8x384xf32> to vector<8x128xf32>
    %279 = arith.addf %277, %278 : vector<8x128xf32>
    %280 = arith.negf %279 : vector<8x128xf32>
    %281 = math.exp %280 : vector<8x128xf32>
    %cst_100 = arith.constant 1.000000e+00 : f32
    %282 = vector.broadcast %cst_100 : f32 to vector<8x128xf32>
    %283 = arith.addf %282, %281 : vector<8x128xf32>
    %284 = arith.divf %282, %283 : vector<8x128xf32>
    %285 = vector.extract_strided_slice %266 {offsets = [0, 256], sizes = [8, 128], strides = [1, 1]} : vector<8x384xf32> to vector<8x128xf32>
    %286 = vector.extract_strided_slice %268 {offsets = [0, 256], sizes = [8, 128], strides = [1, 1]} : vector<8x384xf32> to vector<8x128xf32>
    %287 = arith.addf %286, %10 : vector<8x128xf32>
    %288 = arith.mulf %276, %287 : vector<8x128xf32>
    %289 = arith.addf %285, %288 : vector<8x128xf32>
    %290 = math.tanh %289 : vector<8x128xf32>
    %cst_101 = arith.constant 1.000000e+00 : f32
    %291 = vector.broadcast %cst_101 : f32 to vector<8x128xf32>
    %292 = arith.subf %291, %284 : vector<8x128xf32>
    %293 = arith.mulf %292, %290 : vector<8x128xf32>
    %294 = arith.mulf %284, %259 : vector<8x128xf32>
    %295 = arith.addf %293, %294 : vector<8x128xf32>
    %296 = arith.index_cast %c5_i32_95 : i32 to index
    %c0_102 = arith.constant 0 : index
    %c0_103 = arith.constant 0 : index
    %297 = vector.load %arg8[%296, %c0_102, %c0_103] : memref<8x8x128xf32, #tpu.memory_space<vmem>>, vector<1x8x128xf32>
    %298 = vector.shape_cast %297 : vector<1x8x128xf32> to vector<8x128xf32>
    %299 = vector.shape_cast %295 : vector<8x128xf32> to vector<1x8x128xf32>
    tpu.vector_store %arg8[%296, %c0_102, %c0_103], %299 {strides = array<i32>} : memref<8x8x128xf32, #tpu.memory_space<vmem>>, vector<1x8x128xf32>,
    %c6_i32_104 = arith.constant 6 : i32
    %300 = arith.index_cast %c6_i32_104 : i32 to index
    %c0_105 = arith.constant 0 : index
    %c0_106 = arith.constant 0 : index
    %301 = vector.load %arg10[%300, %c0_105, %c0_106] : memref<8x8x384xf32, #tpu.memory_space<vmem>>, vector<1x8x384xf32>
    %302 = vector.shape_cast %301 : vector<1x8x384xf32> to vector<8x384xf32>
    %303 = arith.truncf %295 : vector<8x128xf32> to vector<8x128xbf16>
    %cst_107 = arith.constant dense<0.000000e+00> : vector<8x384xf32>
    %304 = tpu.matmul %303, %4, %cst_107 {dimension_numbers = #tpu.dot_dimension_numbers<[1], [0], [0], [1], [0, 0, 1, 1], [], []>} : vector<8x128xbf16>, vector<128x384xbf16>, vector<8x384xf32> -> vector<8x384xf32>
    %305 = vector.extract_strided_slice %302 {offsets = [0, 0], sizes = [8, 128], strides = [1, 1]} : vector<8x384xf32> to vector<8x128xf32>
    %306 = vector.extract_strided_slice %304 {offsets = [0, 0], sizes = [8, 128], strides = [1, 1]} : vector<8x384xf32> to vector<8x128xf32>
    %307 = arith.addf %305, %306 : vector<8x128xf32>
    %308 = arith.negf %307 : vector<8x128xf32>
    %309 = math.exp %308 : vector<8x128xf32>
    %cst_108 = arith.constant 1.000000e+00 : f32
    %310 = vector.broadcast %cst_108 : f32 to vector<8x128xf32>
    %311 = arith.addf %310, %309 : vector<8x128xf32>
    %312 = arith.divf %310, %311 : vector<8x128xf32>
    %313 = vector.extract_strided_slice %302 {offsets = [0, 128], sizes = [8, 128], strides = [1, 1]} : vector<8x384xf32> to vector<8x128xf32>
    %314 = vector.extract_strided_slice %304 {offsets = [0, 128], sizes = [8, 128], strides = [1, 1]} : vector<8x384xf32> to vector<8x128xf32>
    %315 = arith.addf %313, %314 : vector<8x128xf32>
    %316 = arith.negf %315 : vector<8x128xf32>
    %317 = math.exp %316 : vector<8x128xf32>
    %cst_109 = arith.constant 1.000000e+00 : f32
    %318 = vector.broadcast %cst_109 : f32 to vector<8x128xf32>
    %319 = arith.addf %318, %317 : vector<8x128xf32>
    %320 = arith.divf %318, %319 : vector<8x128xf32>
    %321 = vector.extract_strided_slice %302 {offsets = [0, 256], sizes = [8, 128], strides = [1, 1]} : vector<8x384xf32> to vector<8x128xf32>
    %322 = vector.extract_strided_slice %304 {offsets = [0, 256], sizes = [8, 128], strides = [1, 1]} : vector<8x384xf32> to vector<8x128xf32>
    %323 = arith.addf %322, %10 : vector<8x128xf32>
    %324 = arith.mulf %312, %323 : vector<8x128xf32>
    %325 = arith.addf %321, %324 : vector<8x128xf32>
    %326 = math.tanh %325 : vector<8x128xf32>
    %cst_110 = arith.constant 1.000000e+00 : f32
    %327 = vector.broadcast %cst_110 : f32 to vector<8x128xf32>
    %328 = arith.subf %327, %320 : vector<8x128xf32>
    %329 = arith.mulf %328, %326 : vector<8x128xf32>
    %330 = arith.mulf %320, %295 : vector<8x128xf32>
    %331 = arith.addf %329, %330 : vector<8x128xf32>
    %332 = arith.index_cast %c6_i32_104 : i32 to index
    %c0_111 = arith.constant 0 : index
    %c0_112 = arith.constant 0 : index
    %333 = vector.load %arg8[%332, %c0_111, %c0_112] : memref<8x8x128xf32, #tpu.memory_space<vmem>>, vector<1x8x128xf32>
    %334 = vector.shape_cast %333 : vector<1x8x128xf32> to vector<8x128xf32>
    %335 = vector.shape_cast %331 : vector<8x128xf32> to vector<1x8x128xf32>
    tpu.vector_store %arg8[%332, %c0_111, %c0_112], %335 {strides = array<i32>} : memref<8x8x128xf32, #tpu.memory_space<vmem>>, vector<1x8x128xf32>,
    %c7_i32_113 = arith.constant 7 : i32
    %336 = arith.index_cast %c7_i32_113 : i32 to index
    %c0_114 = arith.constant 0 : index
    %c0_115 = arith.constant 0 : index
    %337 = vector.load %arg10[%336, %c0_114, %c0_115] : memref<8x8x384xf32, #tpu.memory_space<vmem>>, vector<1x8x384xf32>
    %338 = vector.shape_cast %337 : vector<1x8x384xf32> to vector<8x384xf32>
    %339 = arith.truncf %331 : vector<8x128xf32> to vector<8x128xbf16>
    %cst_116 = arith.constant dense<0.000000e+00> : vector<8x384xf32>
    %340 = tpu.matmul %339, %4, %cst_116 {dimension_numbers = #tpu.dot_dimension_numbers<[1], [0], [0], [1], [0, 0, 1, 1], [], []>} : vector<8x128xbf16>, vector<128x384xbf16>, vector<8x384xf32> -> vector<8x384xf32>
    %341 = vector.extract_strided_slice %338 {offsets = [0, 0], sizes = [8, 128], strides = [1, 1]} : vector<8x384xf32> to vector<8x128xf32>
    %342 = vector.extract_strided_slice %340 {offsets = [0, 0], sizes = [8, 128], strides = [1, 1]} : vector<8x384xf32> to vector<8x128xf32>
    %343 = arith.addf %341, %342 : vector<8x128xf32>
    %344 = arith.negf %343 : vector<8x128xf32>
    %345 = math.exp %344 : vector<8x128xf32>
    %cst_117 = arith.constant 1.000000e+00 : f32
    %346 = vector.broadcast %cst_117 : f32 to vector<8x128xf32>
    %347 = arith.addf %346, %345 : vector<8x128xf32>
    %348 = arith.divf %346, %347 : vector<8x128xf32>
    %349 = vector.extract_strided_slice %338 {offsets = [0, 128], sizes = [8, 128], strides = [1, 1]} : vector<8x384xf32> to vector<8x128xf32>
    %350 = vector.extract_strided_slice %340 {offsets = [0, 128], sizes = [8, 128], strides = [1, 1]} : vector<8x384xf32> to vector<8x128xf32>
    %351 = arith.addf %349, %350 : vector<8x128xf32>
    %352 = arith.negf %351 : vector<8x128xf32>
    %353 = math.exp %352 : vector<8x128xf32>
    %cst_118 = arith.constant 1.000000e+00 : f32
    %354 = vector.broadcast %cst_118 : f32 to vector<8x128xf32>
    %355 = arith.addf %354, %353 : vector<8x128xf32>
    %356 = arith.divf %354, %355 : vector<8x128xf32>
    %357 = vector.extract_strided_slice %338 {offsets = [0, 256], sizes = [8, 128], strides = [1, 1]} : vector<8x384xf32> to vector<8x128xf32>
    %358 = vector.extract_strided_slice %340 {offsets = [0, 256], sizes = [8, 128], strides = [1, 1]} : vector<8x384xf32> to vector<8x128xf32>
    %359 = arith.addf %358, %10 : vector<8x128xf32>
    %360 = arith.mulf %348, %359 : vector<8x128xf32>
    %361 = arith.addf %357, %360 : vector<8x128xf32>
    %362 = math.tanh %361 : vector<8x128xf32>
    %cst_119 = arith.constant 1.000000e+00 : f32
    %363 = vector.broadcast %cst_119 : f32 to vector<8x128xf32>
    %364 = arith.subf %363, %356 : vector<8x128xf32>
    %365 = arith.mulf %364, %362 : vector<8x128xf32>
    %366 = arith.mulf %356, %331 : vector<8x128xf32>
    %367 = arith.addf %365, %366 : vector<8x128xf32>
    %368 = arith.index_cast %c7_i32_113 : i32 to index
    %c0_120 = arith.constant 0 : index
    %c0_121 = arith.constant 0 : index
    %369 = vector.load %arg8[%368, %c0_120, %c0_121] : memref<8x8x128xf32, #tpu.memory_space<vmem>>, vector<1x8x128xf32>
    %370 = vector.shape_cast %369 : vector<1x8x128xf32> to vector<8x128xf32>
    %371 = vector.shape_cast %367 : vector<8x128xf32> to vector<1x8x128xf32>
    tpu.vector_store %arg8[%368, %c0_120, %c0_121], %371 {strides = array<i32>} : memref<8x8x128xf32, #tpu.memory_space<vmem>>, vector<1x8x128xf32>,
    %c8_i32_122 = arith.constant 8 : i32
    %c0_123 = arith.constant 0 : index
    %c0_124 = arith.constant 0 : index
    %372 = vector.load %arg9[%c0_123, %c0_124] : memref<8x128xf32, #tpu.memory_space<vmem>>, vector<8x128xf32>
    tpu.vector_store %arg9[%c0_123, %c0_124], %367 {strides = array<i32>} : memref<8x128xf32, #tpu.memory_space<vmem>>, vector<8x128xf32>,
    return
  }
  func.func @transform_0(%arg0: i32, %arg1: i32) -> (i32, i32, i32) {
    %c0_i32 = arith.constant 0 : i32
    %c0_i32_0 = arith.constant 0 : i32
    return %arg1, %arg0, %c0_i32 : i32, i32, i32
  }
  func.func @transform_1(%arg0: i32, %arg1: i32) -> (i32, i32) {
    %c0_i32 = arith.constant 0 : i32
    %c0_i32_0 = arith.constant 0 : i32
    %c0_i32_1 = arith.constant 0 : i32
    return %c0_i32, %c0_i32_0 : i32, i32
  }
  func.func @transform_2(%arg0: i32, %arg1: i32) -> (i32, i32) {
    %c0_i32 = arith.constant 0 : i32
    %c0_i32_0 = arith.constant 0 : i32
    %c0_i32_1 = arith.constant 0 : i32
    return %c0_i32, %c0_i32_0 : i32, i32
  }
  func.func @transform_3(%arg0: i32, %arg1: i32) -> (i32, i32) {
    %c0_i32 = arith.constant 0 : i32
    %c0_i32_0 = arith.constant 0 : i32
    %c0_i32_1 = arith.constant 0 : i32
    return %c0_i32, %c0_i32_0 : i32, i32
  }
  func.func @transform_4(%arg0: i32, %arg1: i32) -> (i32, i32) {
    %c0_i32 = arith.constant 0 : i32
    %c0_i32_0 = arith.constant 0 : i32
    %c0_i32_1 = arith.constant 0 : i32
    return %c0_i32, %c0_i32_0 : i32, i32
  }
  func.func @transform_5(%arg0: i32, %arg1: i32) -> (i32, i32) {
    %c0_i32 = arith.constant 0 : i32
    %c0_i32_0 = arith.constant 0 : i32
    return %arg0, %c0_i32 : i32, i32
  }
  func.func @transform_6(%arg0: i32, %arg1: i32) -> (i32, i32, i32) {
    %c0_i32 = arith.constant 0 : i32
    %c0_i32_0 = arith.constant 0 : i32
    return %arg1, %arg0, %c0_i32 : i32, i32, i32
  }
  func.func @transform_7(%arg0: i32, %arg1: i32) -> (i32, i32) {
    %c0_i32 = arith.constant 0 : i32
    %c0_i32_0 = arith.constant 0 : i32
    return %arg0, %c0_i32 : i32, i32
  }
}

</mosaic_0001>

<llo_original>
// kernel: tpu_custom_call.1
$region0: #{tpu_custom_call.1}
  #allocation0 [shape = 'u32[]', space=smem, size = 0x4, offset = 0x4, fixed_abs, tag = 'smem constant byte address 0x4 - core index']
  #allocation1 [shape = 'u32[144,128]{1,0:T(1,128)}', space=vmem, size = 0x12000, scoped, tag = 'internal scratch']
  #allocation2 [shape = 'f32[8,8,384]{2,1,0:T(8,128)}', space=vmem, size = 0x18000, scoped, tag = 'scratch operand']
  %s0 = inlined_call_operand.hbm [shape: bf16[8,8,32], index: 0, kind: input, shape index: {}]
  %s1 = inlined_call_operand.hbm [shape: bf16[32,384], index: 1, kind: input, shape index: {}]
  %s2 = inlined_call_operand.hbm [shape: bf16[128,384], index: 2, kind: input, shape index: {}]
  %s3 = inlined_call_operand.vmem [shape: f32[1,384], index: 3, kind: input, shape index: {}]
  %s4 = inlined_call_operand.vmem [shape: f32[1,128], index: 4, kind: input, shape index: {}]
  %s5 = inlined_call_operand.vmem [shape: f32[8,128], index: 5, kind: input, shape index: {}]
  %s6 = inlined_call_operand.hbm [shape: f32[8,8,128], index: 6, kind: output, shape index: {0}]
  %s7 = inlined_call_operand.hbm [shape: f32[8,128], index: 7, kind: output, shape index: {1}]
  %8 = xla_tuple %s6, %s7
  %s9 = sld [smem:[#allocation0]]
  $region58: #{tpu_custom_call.1} parent=0
    _
  %s11 = ssub.s32 1, %s9
  %s12 = scalar_select 0, %s11, %s9
  $region1: #{tpu_custom_call.1} parent=0
    #allocation3 [shape = 'u8[16384]{0}', space=vmem, size = 0x4000, scoped, tag = 'input window, operand 0, single buffered']
    #allocation4 [shape = 's32[1]{0}', space=sflag, size = 0x4, scoped, tag = 'scoped memory for tpu_custom_call.1']
    #allocation5 [shape = 's32[1]{0}', space=sflag, size = 0x4, scoped, tag = 'scoped memory for tpu_custom_call.1']
    #allocation6 [shape = 'u8[24576]{0}', space=vmem, size = 0x6000, scoped, tag = 'input window, operand 1, single buffered']
    #allocation7 [shape = 's32[1]{0}', space=sflag, size = 0x4, scoped, tag = 'scoped memory for tpu_custom_call.1']
    #allocation8 [shape = 'u8[98304]{0}', space=vmem, size = 0x18000, scoped, tag = 'input window, operand 2, single buffered']
    #allocation9 [shape = 'u8[32768]{0}', space=vmem, size = 0x8000, scoped, tag = 'output window, operand 0, single buffered']
    #allocation10 [shape = 'u8[4096]{0}', space=vmem, size = 0x1000, scoped, tag = 'output window, operand 1, single buffered']
    #allocation11 [shape = 's32[1]{0}', space=sflag, size = 0x4, scoped, tag = 'scoped memory for tpu_custom_call.1']
    %13 = vsyncpa [#allocation4], 0
    %14 = vsyncpa [#allocation7], 0
    %15 = vsyncpa [#allocation5], 0
    %16 = vsyncpa [#allocation11], 0
    // Predicated region
    $region2: #{tpu_custom_call.1} parent=1 // pred_check
      _
    $region3: #{tpu_custom_call.1} parent=1 // pred_check_branch
      %18 = sbr.rel (0) target = $region5
    $region4: #{tpu_custom_call.1} parent=1 // pred_region
      %s20 = ssub.s32 512, 512
      %21 = vsyncadd [#allocation4], %s20
      %s22 = sshll.u32 [#allocation3], 4
      %s23 = int_to_ptr.vmem [resolvable:$true] %s22
      %28 = dma.hbm_to_vmem [thread:$0]  %s0, 512, %s23, [#allocation4], 64, 64, 4
    $region5: #{tpu_custom_call.1} parent=1 // pred_fallthru
      _
    // Predicated region
    $region6: #{tpu_custom_call.1} parent=1 // pred_check
      _
    $region7: #{tpu_custom_call.1} parent=1 // pred_check_branch
      %30 = sbr.rel (0) target = $region9
    $region8: #{tpu_custom_call.1} parent=1 // pred_region
      %s32 = ssub.s32 768, 768
      %33 = vsyncadd [#allocation7], %s32
      %s34 = sshll.u32 [#allocation6], 4
      %s35 = int_to_ptr.vmem [resolvable:$true] %s34
      %40 = dma.hbm_to_vmem [thread:$0]  %s1, 768, %s35, [#allocation7], 192, 192, 12
    $region9: #{tpu_custom_call.1} parent=1 // pred_fallthru
      _
    // Predicated region
    $region10: #{tpu_custom_call.1} parent=1 // pred_check
      _
    $region11: #{tpu_custom_call.1} parent=1 // pred_check_branch
      %42 = sbr.rel (0) target = $region13
    $region12: #{tpu_custom_call.1} parent=1 // pred_region
      %s44 = ssub.s32 3072, 3072
      %45 = vsyncadd [#allocation7], %s44
      %s46 = sshll.u32 [#allocation8], 4
      %s47 = int_to_ptr.vmem [resolvable:$true] %s46
      %52 = dma.hbm_to_vmem [thread:$0]  %s2, 3072, %s47, [#allocation7], 192, 192, 12
    $region13: #{tpu_custom_call.1} parent=1 // pred_fallthru
      _
    // Predicated region
    $region14: #{tpu_custom_call.1} parent=1 // pred_check
      _
    $region15: #{tpu_custom_call.1} parent=1 // pred_check_branch
      %54 = sbr.rel (0) target = $region17
    $region16: #{tpu_custom_call.1} parent=1 // pred_region
      _
    $region17: #{tpu_custom_call.1} parent=1 // pred_fallthru
      _
    // Predicated region
    $region18: #{tpu_custom_call.1} parent=1 // pred_check
      _
    $region19: #{tpu_custom_call.1} parent=1 // pred_check_branch
      %56 = sbr.rel (0) target = $region21
    $region20: #{tpu_custom_call.1} parent=1 // pred_region
      _
    $region21: #{tpu_custom_call.1} parent=1 // pred_fallthru
      _
    // Predicated region
    $region22: #{tpu_custom_call.1} parent=1 // pred_check
      _
    $region23: #{tpu_custom_call.1} parent=1 // pred_check_branch
      %58 = sbr.rel (0) target = $region25
    $region24: #{tpu_custom_call.1} parent=1 // pred_region
      _
    $region25: #{tpu_custom_call.1} parent=1 // pred_fallthru
      _
    // Predicated region
    $region26: #{tpu_custom_call.1} parent=1 // pred_check
      _
    $region27: #{tpu_custom_call.1} parent=1 // pred_check_branch
      %60 = sbr.rel (0) target = $region29
    $region28: #{tpu_custom_call.1} parent=1 // pred_region
      %61 = dma.done [#allocation4], 512
    $region29: #{tpu_custom_call.1} parent=1 // pred_fallthru
      _
    // Predicated region
    $region30: #{tpu_custom_call.1} parent=1 // pred_check
      _
    $region31: #{tpu_custom_call.1} parent=1 // pred_check_branch
      %63 = sbr.rel (0) target = $region33
    $region32: #{tpu_custom_call.1} parent=1 // pred_region
      %64 = dma.done [#allocation7], 768
    $region33: #{tpu_custom_call.1} parent=1 // pred_fallthru
      _
    // Predicated region
    $region34: #{tpu_custom_call.1} parent=1 // pred_check
      _
    $region35: #{tpu_custom_call.1} parent=1 // pred_check_branch
      %66 = sbr.rel (0) target = $region37
    $region36: #{tpu_custom_call.1} parent=1 // pred_region
      %67 = dma.done [#allocation7], 3072
    $region37: #{tpu_custom_call.1} parent=1 // pred_fallthru
      _
    %p69 = scmp.eq.s32.totalorder 0, 0
    // Predicated region
    $region38: #{tpu_custom_call.1} parent=1 // pred_check
      %p70 = pneg %p69
    $region39: #{tpu_custom_call.1} parent=1 // pred_check_branch
      %72 = sbr.rel (%p70) target = $region41
    $region40: #{tpu_custom_call.1} parent=1 // pred_region
      %v73 = vld [vmem:[%s5] sm:$0xff]
      %74 = vst [vmem:[#allocation10] sm:$0xff] %v73
    $region41: #{tpu_custom_call.1} parent=1 // pred_fallthru
      _
    %v75 = vld [vmem:[#allocation6] sm:$0xff]
    %v76 = vld [vmem:[#allocation6 + $0x8] sm:$0xf]
    %v77 = vld [vmem:[#allocation6 + $0xc] sm:$0xff]
    %v78 = vld [vmem:[#allocation6 + $0x14] sm:$0xf]
    %v79 = vld [vmem:[#allocation6 + $0x18] sm:$0xff]
    %v80 = vld [vmem:[#allocation6 + $0x20] sm:$0xf]
    %v81 = vld [vmem:[#allocation6 + $0x24] sm:$0xff]
    %v82 = vld [vmem:[#allocation6 + $0x2c] sm:$0xf]
    %v83 = vld [vmem:[#allocation8] sm:$0xff]
    %v84 = vld [vmem:[#allocation8 + $0x8] sm:$0xf]
    %v85 = vld [vmem:[#allocation8 + $0xc] sm:$0xff]
    %v86 = vld [vmem:[#allocation8 + $0x14] sm:$0xf]
    %v87 = vld [vmem:[#allocation8 + $0x18] sm:$0xff]
    %v88 = vld [vmem:[#allocation8 + $0x20] sm:$0xf]
    %v89 = vld [vmem:[#allocation8 + $0x24] sm:$0xff]
    %v90 = vld [vmem:[#allocation8 + $0x2c] sm:$0xf]
    %v91 = vld [vmem:[#allocation8 + $0x30] sm:$0xff]
    %v92 = vld [vmem:[#allocation8 + $0x38] sm:$0xf]
    %v93 = vld [vmem:[#allocation8 + $0x3c] sm:$0xff]
    %v94 = vld [vmem:[#allocation8 + $0x44] sm:$0xf]
    %v95 = vld [vmem:[#allocation8 + $0x48] sm:$0xff]
    %v96 = vld [vmem:[#allocation8 + $0x50] sm:$0xf]
    %v97 = vld [vmem:[#allocation8 + $0x54] sm:$0xff]
    %v98 = vld [vmem:[#allocation8 + $0x5c] sm:$0xf]
    %v99 = vld [vmem:[#allocation8 + $0x60] sm:$0xff]
    %v100 = vld [vmem:[#allocation8 + $0x68] sm:$0xf]
    %v101 = vld [vmem:[#allocation8 + $0x6c] sm:$0xff]
    %v102 = vld [vmem:[#allocation8 + $0x74] sm:$0xf]
    %v103 = vld [vmem:[#allocation8 + $0x78] sm:$0xff]
    %v104 = vld [vmem:[#allocation8 + $0x80] sm:$0xf]
    %v105 = vld [vmem:[#allocation8 + $0x84] sm:$0xff]
    %v106 = vld [vmem:[#allocation8 + $0x8c] sm:$0xf]
    %v107 = vld [vmem:[#allocation8 + $0x90] sm:$0xff]
    %v108 = vld [vmem:[#allocation8 + $0x98] sm:$0xf]
    %v109 = vld [vmem:[#allocation8 + $0x9c] sm:$0xff]
    %v110 = vld [vmem:[#allocation8 + $0xa4] sm:$0xf]
    %v111 = vld [vmem:[#allocation8 + $0xa8] sm:$0xff]
    %v112 = vld [vmem:[#allocation8 + $0xb0] sm:$0xf]
    %v113 = vld [vmem:[#allocation8 + $0xb4] sm:$0xff]
    %v114 = vld [vmem:[#allocation8 + $0xbc] sm:$0xf]
    %v115 = vld [vmem:[%s3] sm:$0x7]
    %v117 = vlaneseq
    %v118 = vshrl.u32 %v117, 7
    %v119 = vsub.s32 0, %v118
    %v120 = vrot.slane %v115, %v119
    %v121 = vlaneseq
    %v122 = vshrl.u32 %v121, 7
    %v123 = vsub.s32 1, %v122
    %v124 = vrot.slane %v115, %v123
    %v125 = vlaneseq
    %v126 = vshrl.u32 %v125, 7
    %v127 = vsub.s32 2, %v126
    %v128 = vrot.slane %v115, %v127
    %v132 = vld [vmem:[%s4] sm:$0x1]
    %v134 = vlaneseq
    %v135 = vshrl.u32 %v134, 7
    %v136 = vsub.s32 0, %v135
    %v137 = vrot.slane %v132, %v136
    %v139 = vld [vmem:[#allocation3] sm:$0xf]
    %v148 = vunpack.c.l.b16 %v75
    %v149 = vunpack.c.h.b16 %v75
    %v150 = vunpack.c.l.b16 %v76
    %v151 = vunpack.c.l.b16 %v77
    %v152 = vunpack.c.h.b16 %v77
    %v153 = vunpack.c.l.b16 %v78
    %v154 = vunpack.c.l.b16 %v79
    %v155 = vunpack.c.h.b16 %v79
    %v156 = vunpack.c.l.b16 %v80
    %v157 = vunpack.c.l.b16 %v81
    %v158 = vunpack.c.h.b16 %v81
    %v159 = vunpack.c.l.b16 %v82
    %v160 = vpack.c.b16 %v151, %v148
    %v161 = vpack.c.b16 %v152, %v149
    %v162 = vpack.c.b16 %v153, %v150
    %v163 = vpack.c.b16 %v157, %v154
    %v164 = vpack.c.b16 %v158, %v155
    %v165 = vpack.c.b16 %v159, %v156
    %vm172 = vcmask 261120
    %v174 = vsel %vm172, %v139, 0
    %176 = vmatprep.subr.bf16.mxu0 %v161
    %177 = vmatpush1.bf16.msra.mxu0 %v160
    %178 = vmatprep.subr.bf16.mxu0 %v164
    %179 = vmatpush1.bf16.msra.mxu0 %v163
    %180 = vmatprep.subr.bf16.mxu0 0
    %181 = vmatpush1.bf16.msra.mxu0 0
    %182 = vmatprep.subr.bf16.mxu0 0
    %183 = vmatpush1.bf16.msra.mxu0 0
    %184 = vmatprep.subr.bf16.mxu0 0
    %185 = vmatpush1.bf16.msra.mxu0 0
    %186 = vmatprep.subr.bf16.mxu0 0
    %187 = vmatpush1.bf16.msra.mxu0 0
    %188 = vmatprep.subr.bf16.mxu0 0
    %189 = vmatpush1.bf16.msra.mxu0 0
    %190 = vmatprep.subr.bf16.mxu0 0
    %191 = vmatpush1.bf16.msra.mxu0 0
    %192 = vmatprep.subr.bf16.mxu0 0
    %193 = vmatpush1.bf16.msra.mxu0 0
    %194 = vmatprep.subr.bf16.mxu0 0
    %195 = vmatpush1.bf16.msra.mxu0 0
    %196 = vmatprep.subr.bf16.mxu0 0
    %197 = vmatpush1.bf16.msra.mxu0 0
    %198 = vmatprep.subr.bf16.mxu0 0
    %199 = vmatpush1.bf16.msra.mxu0 0
    %200 = vmatprep.subr.bf16.mxu0 0
    %201 = vmatpush1.bf16.msra.mxu0 0
    %202 = vmatprep.subr.bf16.mxu0 0
    %203 = vmatpush1.bf16.msra.mxu0 0
    %204 = vmatprep.subr.bf16.mxu0 0
    %205 = vmatpush1.bf16.msra.mxu0 0
    %206 = vmatprep.subr.bf16.mxu0 0
    %207 = vmatpush1.bf16.msra.mxu0 0
    %208 = vmatprep.mubr.bf16.mxu0 0
    %209 = vmatmul.mubr.bf16.gmra.mrb[0].mxu0 %v174
    %v210 = vpop.f32.mrb[0].mxu0
    %v211 = vadd.f32 %v120, %v210
    %v212 = vpop.f32.mrb[0].mxu0
    %v213 = vadd.f32 %v124, %v212
    %v214 = vpop.f32.mrb[0].mxu0
    %v215 = vpop.f32.mrb[0].mxu0
    %216 = vdwg.mxu0
    %217 = vmatprep.subr.bf16.mxu0 0
    %218 = vmatpush1.bf16.msra.mxu0 %v162
    %219 = vmatprep.subr.bf16.mxu0 0
    %220 = vmatpush1.bf16.msra.mxu0 %v165
    %221 = vmatprep.subr.bf16.mxu0 0
    %222 = vmatpush1.bf16.msra.mxu0 0
    %223 = vmatprep.subr.bf16.mxu0 0
    %224 = vmatpush1.bf16.msra.mxu0 0
    %225 = vmatprep.subr.bf16.mxu0 0
    %226 = vmatpush1.bf16.msra.mxu0 0
    %227 = vmatprep.subr.bf16.mxu0 0
    %228 = vmatpush1.bf16.msra.mxu0 0
    %229 = vmatprep.subr.bf16.mxu0 0
    %230 = vmatpush1.bf16.msra.mxu0 0
    %231 = vmatprep.subr.bf16.mxu0 0
    %232 = vmatpush1.bf16.msra.mxu0 0
    %233 = vmatprep.subr.bf16.mxu0 0
    %234 = vmatpush1.bf16.msra.mxu0 0
    %235 = vmatprep.subr.bf16.mxu0 0
    %236 = vmatpush1.bf16.msra.mxu0 0
    %237 = vmatprep.subr.bf16.mxu0 0
    %238 = vmatpush1.bf16.msra.mxu0 0
    %239 = vmatprep.subr.bf16.mxu0 0
    %240 = vmatpush1.bf16.msra.mxu0 0
    %241 = vmatprep.subr.bf16.mxu0 0
    %242 = vmatpush1.bf16.msra.mxu0 0
    %243 = vmatprep.subr.bf16.mxu0 0
    %244 = vmatpush1.bf16.msra.mxu0 0
    %245 = vmatprep.subr.bf16.mxu0 0
    %246 = vmatpush1.bf16.msra.mxu0 0
    %247 = vmatprep.subr.bf16.mxu0 0
    %248 = vmatpush1.bf16.msra.mxu0 0
    %249 = vmatprep.mubr.bf16.mxu0 0
    %250 = vmatmul.mubr.bf16.gmra.mrb[0].mxu0 %v174
    %v251 = vpop.f32.mrb[0].mxu0
    %v252 = vadd.f32 %v128, %v251
    %v253 = vpop.f32.mrb[0].mxu0
    %v254 = vpop.f32.mrb[0].mxu0
    %v255 = vpop.f32.mrb[0].mxu0
    %256 = vdwg.mxu0
    %257 = vst [vmem:[#allocation2] sm:$0xff] %v211
    %258 = vst [vmem:[#allocation2 + $0x8] sm:$0xff] %v213
    %259 = vst [vmem:[#allocation2 + $0x10] sm:$0xff] %v252
    %s260 = scalar_lea.vmem [#allocation3], 4
    %v261 = vld [vmem:[%s260] sm:$0xf]
    %v263 = vsel %vm172, %v261, 0
    %265 = vmatprep.subr.bf16.mxu0 %v161
    %266 = vmatpush1.bf16.msra.mxu0 %v160
    %267 = vmatprep.subr.bf16.mxu0 %v164
    %268 = vmatpush1.bf16.msra.mxu0 %v163
    %269 = vmatprep.subr.bf16.mxu0 0
    %270 = vmatpush1.bf16.msra.mxu0 0
    %271 = vmatprep.subr.bf16.mxu0 0
    %272 = vmatpush1.bf16.msra.mxu0 0
    %273 = vmatprep.subr.bf16.mxu0 0
    %274 = vmatpush1.bf16.msra.mxu0 0
    %275 = vmatprep.subr.bf16.mxu0 0
    %276 = vmatpush1.bf16.msra.mxu0 0
    %277 = vmatprep.subr.bf16.mxu0 0
    %278 = vmatpush1.bf16.msra.mxu0 0
    %279 = vmatprep.subr.bf16.mxu0 0
    %280 = vmatpush1.bf16.msra.mxu0 0
    %281 = vmatprep.subr.bf16.mxu0 0
    %282 = vmatpush1.bf16.msra.mxu0 0
    %283 = vmatprep.subr.bf16.mxu0 0
    %284 = vmatpush1.bf16.msra.mxu0 0
    %285 = vmatprep.subr.bf16.mxu0 0
    %286 = vmatpush1.bf16.msra.mxu0 0
    %287 = vmatprep.subr.bf16.mxu0 0
    %288 = vmatpush1.bf16.msra.mxu0 0
    %289 = vmatprep.subr.bf16.mxu0 0
    %290 = vmatpush1.bf16.msra.mxu0 0
    %291 = vmatprep.subr.bf16.mxu0 0
    %292 = vmatpush1.bf16.msra.mxu0 0
    %293 = vmatprep.subr.bf16.mxu0 0
    %294 = vmatpush1.bf16.msra.mxu0 0
    %295 = vmatprep.subr.bf16.mxu0 0
    %296 = vmatpush1.bf16.msra.mxu0 0
    %297 = vmatprep.mubr.bf16.mxu0 0
    %298 = vmatmul.mubr.bf16.gmra.mrb[0].mxu0 %v263
    %v299 = vpop.f32.mrb[0].mxu0
    %v300 = vadd.f32 %v120, %v299
    %v301 = vpop.f32.mrb[0].mxu0
    %v302 = vadd.f32 %v124, %v301
    %v303 = vpop.f32.mrb[0].mxu0
    %v304 = vpop.f32.mrb[0].mxu0
    %305 = vdwg.mxu0
    %306 = vmatprep.subr.bf16.mxu0 0
    %307 = vmatpush1.bf16.msra.mxu0 %v162
    %308 = vmatprep.subr.bf16.mxu0 0
    %309 = vmatpush1.bf16.msra.mxu0 %v165
    %310 = vmatprep.subr.bf16.mxu0 0
    %311 = vmatpush1.bf16.msra.mxu0 0
    %312 = vmatprep.subr.bf16.mxu0 0
    %313 = vmatpush1.bf16.msra.mxu0 0
    %314 = vmatprep.subr.bf16.mxu0 0
    %315 = vmatpush1.bf16.msra.mxu0 0
    %316 = vmatprep.subr.bf16.mxu0 0
    %317 = vmatpush1.bf16.msra.mxu0 0
    %318 = vmatprep.subr.bf16.mxu0 0
    %319 = vmatpush1.bf16.msra.mxu0 0
    %320 = vmatprep.subr.bf16.mxu0 0
    %321 = vmatpush1.bf16.msra.mxu0 0
    %322 = vmatprep.subr.bf16.mxu0 0
    %323 = vmatpush1.bf16.msra.mxu0 0
    %324 = vmatprep.subr.bf16.mxu0 0
    %325 = vmatpush1.bf16.msra.mxu0 0
    %326 = vmatprep.subr.bf16.mxu0 0
    %327 = vmatpush1.bf16.msra.mxu0 0
    %328 = vmatprep.subr.bf16.mxu0 0
    %329 = vmatpush1.bf16.msra.mxu0 0
    %330 = vmatprep.subr.bf16.mxu0 0
    %331 = vmatpush1.bf16.msra.mxu0 0
    %332 = vmatprep.subr.bf16.mxu0 0
    %333 = vmatpush1.bf16.msra.mxu0 0
    %334 = vmatprep.subr.bf16.mxu0 0
    %335 = vmatpush1.bf16.msra.mxu0 0
    %336 = vmatprep.subr.bf16.mxu0 0
    %337 = vmatpush1.bf16.msra.mxu0 0
    %338 = vmatprep.mubr.bf16.mxu0 0
    %339 = vmatmul.mubr.bf16.gmra.mrb[0].mxu0 %v263
    %v340 = vpop.f32.mrb[0].mxu0
    %v341 = vadd.f32 %v128, %v340
    %v342 = vpop.f32.mrb[0].mxu0
    %v343 = vpop.f32.mrb[0].mxu0
    %v344 = vpop.f32.mrb[0].mxu0
    %345 = vdwg.mxu0
    %s346 = scalar_lea.vmem [#allocation2], 24
    %347 = vst [vmem:[%s346] sm:$0xff] %v300
    %348 = vst [vmem:[%s346 + $0x8] sm:$0xff] %v302
    %349 = vst [vmem:[%s346 + $0x10] sm:$0xff] %v341
    %s350 = scalar_lea.vmem [#allocation3], 8
    %v351 = vld [vmem:[%s350] sm:$0xf]
    %v353 = vsel %vm172, %v351, 0
    %355 = vmatprep.subr.bf16.mxu0 %v161
    %356 = vmatpush1.bf16.msra.mxu0 %v160
    %357 = vmatprep.subr.bf16.mxu0 %v164
    %358 = vmatpush1.bf16.msra.mxu0 %v163
    %359 = vmatprep.subr.bf16.mxu0 0
    %360 = vmatpush1.bf16.msra.mxu0 0
    %361 = vmatprep.subr.bf16.mxu0 0
    %362 = vmatpush1.bf16.msra.mxu0 0
    %363 = vmatprep.subr.bf16.mxu0 0
    %364 = vmatpush1.bf16.msra.mxu0 0
    %365 = vmatprep.subr.bf16.mxu0 0
    %366 = vmatpush1.bf16.msra.mxu0 0
    %367 = vmatprep.subr.bf16.mxu0 0
    %368 = vmatpush1.bf16.msra.mxu0 0
    %369 = vmatprep.subr.bf16.mxu0 0
    %370 = vmatpush1.bf16.msra.mxu0 0
    %371 = vmatprep.subr.bf16.mxu0 0
    %372 = vmatpush1.bf16.msra.mxu0 0
    %373 = vmatprep.subr.bf16.mxu0 0
    %374 = vmatpush1.bf16.msra.mxu0 0
    %375 = vmatprep.subr.bf16.mxu0 0
    %376 = vmatpush1.bf16.msra.mxu0 0
    %377 = vmatprep.subr.bf16.mxu0 0
    %378 = vmatpush1.bf16.msra.mxu0 0
    %379 = vmatprep.subr.bf16.mxu0 0
    %380 = vmatpush1.bf16.msra.mxu0 0
    %381 = vmatprep.subr.bf16.mxu0 0
    %382 = vmatpush1.bf16.msra.mxu0 0
    %383 = vmatprep.subr.bf16.mxu0 0
    %384 = vmatpush1.bf16.msra.mxu0 0
    %385 = vmatprep.subr.bf16.mxu0 0
    %386 = vmatpush1.bf16.msra.mxu0 0
    %387 = vmatprep.mubr.bf16.mxu0 0
    %388 = vmatmul.mubr.bf16.gmra.mrb[0].mxu0 %v353
    %v389 = vpop.f32.mrb[0].mxu0
    %v390 = vadd.f32 %v120, %v389
    %v391 = vpop.f32.mrb[0].mxu0
    %v392 = vadd.f32 %v124, %v391
    %v393 = vpop.f32.mrb[0].mxu0
    %v394 = vpop.f32.mrb[0].mxu0
    %395 = vdwg.mxu0
    %396 = vmatprep.subr.bf16.mxu0 0
    %397 = vmatpush1.bf16.msra.mxu0 %v162
    %398 = vmatprep.subr.bf16.mxu0 0
    %399 = vmatpush1.bf16.msra.mxu0 %v165
    %400 = vmatprep.subr.bf16.mxu0 0
    %401 = vmatpush1.bf16.msra.mxu0 0
    %402 = vmatprep.subr.bf16.mxu0 0
    %403 = vmatpush1.bf16.msra.mxu0 0
    %404 = vmatprep.subr.bf16.mxu0 0
    %405 = vmatpush1.bf16.msra.mxu0 0
    %406 = vmatprep.subr.bf16.mxu0 0
    %407 = vmatpush1.bf16.msra.mxu0 0
    %408 = vmatprep.subr.bf16.mxu0 0
    %409 = vmatpush1.bf16.msra.mxu0 0
    %410 = vmatprep.subr.bf16.mxu0 0
    %411 = vmatpush1.bf16.msra.mxu0 0
    %412 = vmatprep.subr.bf16.mxu0 0
    %413 = vmatpush1.bf16.msra.mxu0 0
    %414 = vmatprep.subr.bf16.mxu0 0
    %415 = vmatpush1.bf16.msra.mxu0 0
    %416 = vmatprep.subr.bf16.mxu0 0
    %417 = vmatpush1.bf16.msra.mxu0 0
    %418 = vmatprep.subr.bf16.mxu0 0
    %419 = vmatpush1.bf16.msra.mxu0 0
    %420 = vmatprep.subr.bf16.mxu0 0
    %421 = vmatpush1.bf16.msra.mxu0 0
    %422 = vmatprep.subr.bf16.mxu0 0
    %423 = vmatpush1.bf16.msra.mxu0 0
    %424 = vmatprep.subr.bf16.mxu0 0
    %425 = vmatpush1.bf16.msra.mxu0 0
    %426 = vmatprep.subr.bf16.mxu0 0
    %427 = vmatpush1.bf16.msra.mxu0 0
    %428 = vmatprep.mubr.bf16.mxu0 0
    %429 = vmatmul.mubr.bf16.gmra.mrb[0].mxu0 %v353
    %v430 = vpop.f32.mrb[0].mxu0
    %v431 = vadd.f32 %v128, %v430
    %v432 = vpop.f32.mrb[0].mxu0
    %v433 = vpop.f32.mrb[0].mxu0
    %v434 = vpop.f32.mrb[0].mxu0
    %435 = vdwg.mxu0
    %s436 = scalar_lea.vmem [#allocation2], 48
    %437 = vst [vmem:[%s436] sm:$0xff] %v390
    %438 = vst [vmem:[%s436 + $0x8] sm:$0xff] %v392
    %439 = vst [vmem:[%s436 + $0x10] sm:$0xff] %v431
    %s440 = scalar_lea.vmem [#allocation3], 12
    %v441 = vld [vmem:[%s440] sm:$0xf]
    %v443 = vsel %vm172, %v441, 0
    %445 = vmatprep.subr.bf16.mxu0 %v161
    %446 = vmatpush1.bf16.msra.mxu0 %v160
    %447 = vmatprep.subr.bf16.mxu0 %v164
    %448 = vmatpush1.bf16.msra.mxu0 %v163
    %449 = vmatprep.subr.bf16.mxu0 0
    %450 = vmatpush1.bf16.msra.mxu0 0
    %451 = vmatprep.subr.bf16.mxu0 0
    %452 = vmatpush1.bf16.msra.mxu0 0
    %453 = vmatprep.subr.bf16.mxu0 0
    %454 = vmatpush1.bf16.msra.mxu0 0
    %455 = vmatprep.subr.bf16.mxu0 0
    %456 = vmatpush1.bf16.msra.mxu0 0
    %457 = vmatprep.subr.bf16.mxu0 0
    %458 = vmatpush1.bf16.msra.mxu0 0
    %459 = vmatprep.subr.bf16.mxu0 0
    %460 = vmatpush1.bf16.msra.mxu0 0
    %461 = vmatprep.subr.bf16.mxu0 0
    %462 = vmatpush1.bf16.msra.mxu0 0
    %463 = vmatprep.subr.bf16.mxu0 0
    %464 = vmatpush1.bf16.msra.mxu0 0
    %465 = vmatprep.subr.bf16.mxu0 0
    %466 = vmatpush1.bf16.msra.mxu0 0
    %467 = vmatprep.subr.bf16.mxu0 0
    %468 = vmatpush1.bf16.msra.mxu0 0
    %469 = vmatprep.subr.bf16.mxu0 0
    %470 = vmatpush1.bf16.msra.mxu0 0
    %471 = vmatprep.subr.bf16.mxu0 0
    %472 = vmatpush1.bf16.msra.mxu0 0
    %473 = vmatprep.subr.bf16.mxu0 0
    %474 = vmatpush1.bf16.msra.mxu0 0
    %475 = vmatprep.subr.bf16.mxu0 0
    %476 = vmatpush1.bf16.msra.mxu0 0
    %477 = vmatprep.mubr.bf16.mxu0 0
    %478 = vmatmul.mubr.bf16.gmra.mrb[0].mxu0 %v443
    %v479 = vpop.f32.mrb[0].mxu0
    %v480 = vadd.f32 %v120, %v479
    %v481 = vpop.f32.mrb[0].mxu0
    %v482 = vadd.f32 %v124, %v481
    %v483 = vpop.f32.mrb[0].mxu0
    %v484 = vpop.f32.mrb[0].mxu0
    %485 = vdwg.mxu0
    %486 = vmatprep.subr.bf16.mxu0 0
    %487 = vmatpush1.bf16.msra.mxu0 %v162
    %488 = vmatprep.subr.bf16.mxu0 0
    %489 = vmatpush1.bf16.msra.mxu0 %v165
    %490 = vmatprep.subr.bf16.mxu0 0
    %491 = vmatpush1.bf16.msra.mxu0 0
    %492 = vmatprep.subr.bf16.mxu0 0
    %493 = vmatpush1.bf16.msra.mxu0 0
    %494 = vmatprep.subr.bf16.mxu0 0
    %495 = vmatpush1.bf16.msra.mxu0 0
    %496 = vmatprep.subr.bf16.mxu0 0
    %497 = vmatpush1.bf16.msra.mxu0 0
    %498 = vmatprep.subr.bf16.mxu0 0
    %499 = vmatpush1.bf16.msra.mxu0 0
    %500 = vmatprep.subr.bf16.mxu0 0
    %501 = vmatpush1.bf16.msra.mxu0 0
    %502 = vmatprep.subr.bf16.mxu0 0
    %503 = vmatpush1.bf16.msra.mxu0 0
    %504 = vmatprep.subr.bf16.mxu0 0
    %505 = vmatpush1.bf16.msra.mxu0 0
    %506 = vmatprep.subr.bf16.mxu0 0
    %507 = vmatpush1.bf16.msra.mxu0 0
    %508 = vmatprep.subr.bf16.mxu0 0
    %509 = vmatpush1.bf16.msra.mxu0 0
    %510 = vmatprep.subr.bf16.mxu0 0
    %511 = vmatpush1.bf16.msra.mxu0 0
    %512 = vmatprep.subr.bf16.mxu0 0
    %513 = vmatpush1.bf16.msra.mxu0 0
    %514 = vmatprep.subr.bf16.mxu0 0
    %515 = vmatpush1.bf16.msra.mxu0 0
    %516 = vmatprep.subr.bf16.mxu0 0
    %517 = vmatpush1.bf16.msra.mxu0 0
    %518 = vmatprep.mubr.bf16.mxu0 0
    %519 = vmatmul.mubr.bf16.gmra.mrb[0].mxu0 %v443
    %v520 = vpop.f32.mrb[0].mxu0
    %v521 = vadd.f32 %v128, %v520
    %v522 = vpop.f32.mrb[0].mxu0
    %v523 = vpop.f32.mrb[0].mxu0
    %v524 = vpop.f32.mrb[0].mxu0
    %525 = vdwg.mxu0
    %s526 = scalar_lea.vmem [#allocation2], 72
    %527 = vst [vmem:[%s526] sm:$0xff] %v480
    %528 = vst [vmem:[%s526 + $0x8] sm:$0xff] %v482
    %529 = vst [vmem:[%s526 + $0x10] sm:$0xff] %v521
    %s530 = scalar_lea.vmem [#allocation3], 16
    %v531 = vld [vmem:[%s530] sm:$0xf]
    %v533 = vsel %vm172, %v531, 0
    %535 = vmatprep.subr.bf16.mxu0 %v161
    %536 = vmatpush1.bf16.msra.mxu0 %v160
    %537 = vmatprep.subr.bf16.mxu0 %v164
    %538 = vmatpush1.bf16.msra.mxu0 %v163
    %539 = vmatprep.subr.bf16.mxu0 0
    %540 = vmatpush1.bf16.msra.mxu0 0
    %541 = vmatprep.subr.bf16.mxu0 0
    %542 = vmatpush1.bf16.msra.mxu0 0
    %543 = vmatprep.subr.bf16.mxu0 0
    %544 = vmatpush1.bf16.msra.mxu0 0
    %545 = vmatprep.subr.bf16.mxu0 0
    %546 = vmatpush1.bf16.msra.mxu0 0
    %547 = vmatprep.subr.bf16.mxu0 0
    %548 = vmatpush1.bf16.msra.mxu0 0
    %549 = vmatprep.subr.bf16.mxu0 0
    %550 = vmatpush1.bf16.msra.mxu0 0
    %551 = vmatprep.subr.bf16.mxu0 0
    %552 = vmatpush1.bf16.msra.mxu0 0
    %553 = vmatprep.subr.bf16.mxu0 0
    %554 = vmatpush1.bf16.msra.mxu0 0
    %555 = vmatprep.subr.bf16.mxu0 0
    %556 = vmatpush1.bf16.msra.mxu0 0
    %557 = vmatprep.subr.bf16.mxu0 0
    %558 = vmatpush1.bf16.msra.mxu0 0
    %559 = vmatprep.subr.bf16.mxu0 0
    %560 = vmatpush1.bf16.msra.mxu0 0
    %561 = vmatprep.subr.bf16.mxu0 0
    %562 = vmatpush1.bf16.msra.mxu0 0
    %563 = vmatprep.subr.bf16.mxu0 0
    %564 = vmatpush1.bf16.msra.mxu0 0
    %565 = vmatprep.subr.bf16.mxu0 0
    %566 = vmatpush1.bf16.msra.mxu0 0
    %567 = vmatprep.mubr.bf16.mxu0 0
    %568 = vmatmul.mubr.bf16.gmra.mrb[0].mxu0 %v533
    %v569 = vpop.f32.mrb[0].mxu0
    %v570 = vadd.f32 %v120, %v569
    %v571 = vpop.f32.mrb[0].mxu0
    %v572 = vadd.f32 %v124, %v571
    %v573 = vpop.f32.mrb[0].mxu0
    %v574 = vpop.f32.mrb[0].mxu0
    %575 = vdwg.mxu0
    %576 = vmatprep.subr.bf16.mxu0 0
    %577 = vmatpush1.bf16.msra.mxu0 %v162
    %578 = vmatprep.subr.bf16.mxu0 0
    %579 = vmatpush1.bf16.msra.mxu0 %v165
    %580 = vmatprep.subr.bf16.mxu0 0
    %581 = vmatpush1.bf16.msra.mxu0 0
    %582 = vmatprep.subr.bf16.mxu0 0
    %583 = vmatpush1.bf16.msra.mxu0 0
    %584 = vmatprep.subr.bf16.mxu0 0
    %585 = vmatpush1.bf16.msra.mxu0 0
    %586 = vmatprep.subr.bf16.mxu0 0
    %587 = vmatpush1.bf16.msra.mxu0 0
    %588 = vmatprep.subr.bf16.mxu0 0
    %589 = vmatpush1.bf16.msra.mxu0 0
    %590 = vmatprep.subr.bf16.mxu0 0
    %591 = vmatpush1.bf16.msra.mxu0 0
    %592 = vmatprep.subr.bf16.mxu0 0
    %593 = vmatpush1.bf16.msra.mxu0 0
    %594 = vmatprep.subr.bf16.mxu0 0
    %595 = vmatpush1.bf16.msra.mxu0 0
    %596 = vmatprep.subr.bf16.mxu0 0
    %597 = vmatpush1.bf16.msra.mxu0 0
    %598 = vmatprep.subr.bf16.mxu0 0
    %599 = vmatpush1.bf16.msra.mxu0 0
    %600 = vmatprep.subr.bf16.mxu0 0
    %601 = vmatpush1.bf16.msra.mxu0 0
    %602 = vmatprep.subr.bf16.mxu0 0
    %603 = vmatpush1.bf16.msra.mxu0 0
    %604 = vmatprep.subr.bf16.mxu0 0
    %605 = vmatpush1.bf16.msra.mxu0 0
    %606 = vmatprep.subr.bf16.mxu0 0
    %607 = vmatpush1.bf16.msra.mxu0 0
    %608 = vmatprep.mubr.bf16.mxu0 0
    %609 = vmatmul.mubr.bf16.gmra.mrb[0].mxu0 %v533
    %v610 = vpop.f32.mrb[0].mxu0
    %v611 = vadd.f32 %v128, %v610
    %v612 = vpop.f32.mrb[0].mxu0
    %v613 = vpop.f32.mrb[0].mxu0
    %v614 = vpop.f32.mrb[0].mxu0
    %615 = vdwg.mxu0
    %s616 = scalar_lea.vmem [#allocation2], 96
    %617 = vst [vmem:[%s616] sm:$0xff] %v570
    %618 = vst [vmem:[%s616 + $0x8] sm:$0xff] %v572
    %619 = vst [vmem:[%s616 + $0x10] sm:$0xff] %v611
    %s620 = scalar_lea.vmem [#allocation3], 20
    %v621 = vld [vmem:[%s620] sm:$0xf]
    %v623 = vsel %vm172, %v621, 0
    %625 = vmatprep.subr.bf16.mxu0 %v161
    %626 = vmatpush1.bf16.msra.mxu0 %v160
    %627 = vmatprep.subr.bf16.mxu0 %v164
    %628 = vmatpush1.bf16.msra.mxu0 %v163
    %629 = vmatprep.subr.bf16.mxu0 0
    %630 = vmatpush1.bf16.msra.mxu0 0
    %631 = vmatprep.subr.bf16.mxu0 0
    %632 = vmatpush1.bf16.msra.mxu0 0
    %633 = vmatprep.subr.bf16.mxu0 0
    %634 = vmatpush1.bf16.msra.mxu0 0
    %635 = vmatprep.subr.bf16.mxu0 0
    %636 = vmatpush1.bf16.msra.mxu0 0
    %637 = vmatprep.subr.bf16.mxu0 0
    %638 = vmatpush1.bf16.msra.mxu0 0
    %639 = vmatprep.subr.bf16.mxu0 0
    %640 = vmatpush1.bf16.msra.mxu0 0
    %641 = vmatprep.subr.bf16.mxu0 0
    %642 = vmatpush1.bf16.msra.mxu0 0
    %643 = vmatprep.subr.bf16.mxu0 0
    %644 = vmatpush1.bf16.msra.mxu0 0
    %645 = vmatprep.subr.bf16.mxu0 0
    %646 = vmatpush1.bf16.msra.mxu0 0
    %647 = vmatprep.subr.bf16.mxu0 0
    %648 = vmatpush1.bf16.msra.mxu0 0
    %649 = vmatprep.subr.bf16.mxu0 0
    %650 = vmatpush1.bf16.msra.mxu0 0
    %651 = vmatprep.subr.bf16.mxu0 0
    %652 = vmatpush1.bf16.msra.mxu0 0
    %653 = vmatprep.subr.bf16.mxu0 0
    %654 = vmatpush1.bf16.msra.mxu0 0
    %655 = vmatprep.subr.bf16.mxu0 0
    %656 = vmatpush1.bf16.msra.mxu0 0
    %657 = vmatprep.mubr.bf16.mxu0 0
    %658 = vmatmul.mubr.bf16.gmra.mrb[0].mxu0 %v623
    %v659 = vpop.f32.mrb[0].mxu0
    %v660 = vadd.f32 %v120, %v659
    %v661 = vpop.f32.mrb[0].mxu0
    %v662 = vadd.f32 %v124, %v661
    %v663 = vpop.f32.mrb[0].mxu0
    %v664 = vpop.f32.mrb[0].mxu0
    %665 = vdwg.mxu0
    %666 = vmatprep.subr.bf16.mxu0 0
    %667 = vmatpush1.bf16.msra.mxu0 %v162
    %668 = vmatprep.subr.bf16.mxu0 0
    %669 = vmatpush1.bf16.msra.mxu0 %v165
    %670 = vmatprep.subr.bf16.mxu0 0
    %671 = vmatpush1.bf16.msra.mxu0 0
    %672 = vmatprep.subr.bf16.mxu0 0
    %673 = vmatpush1.bf16.msra.mxu0 0
    %674 = vmatprep.subr.bf16.mxu0 0
    %675 = vmatpush1.bf16.msra.mxu0 0
    %676 = vmatprep.subr.bf16.mxu0 0
    %677 = vmatpush1.bf16.msra.mxu0 0
    %678 = vmatprep.subr.bf16.mxu0 0
    %679 = vmatpush1.bf16.msra.mxu0 0
    %680 = vmatprep.subr.bf16.mxu0 0
    %681 = vmatpush1.bf16.msra.mxu0 0
    %682 = vmatprep.subr.bf16.mxu0 0
    %683 = vmatpush1.bf16.msra.mxu0 0
    %684 = vmatprep.subr.bf16.mxu0 0
    %685 = vmatpush1.bf16.msra.mxu0 0
    %686 = vmatprep.subr.bf16.mxu0 0
    %687 = vmatpush1.bf16.msra.mxu0 0
    %688 = vmatprep.subr.bf16.mxu0 0
    %689 = vmatpush1.bf16.msra.mxu0 0
    %690 = vmatprep.subr.bf16.mxu0 0
    %691 = vmatpush1.bf16.msra.mxu0 0
    %692 = vmatprep.subr.bf16.mxu0 0
    %693 = vmatpush1.bf16.msra.mxu0 0
    %694 = vmatprep.subr.bf16.mxu0 0
    %695 = vmatpush1.bf16.msra.mxu0 0
    %696 = vmatprep.subr.bf16.mxu0 0
    %697 = vmatpush1.bf16.msra.mxu0 0
    %698 = vmatprep.mubr.bf16.mxu0 0
    %699 = vmatmul.mubr.bf16.gmra.mrb[0].mxu0 %v623
    %v700 = vpop.f32.mrb[0].mxu0
    %v701 = vadd.f32 %v128, %v700
    %v702 = vpop.f32.mrb[0].mxu0
    %v703 = vpop.f32.mrb[0].mxu0
    %v704 = vpop.f32.mrb[0].mxu0
    %705 = vdwg.mxu0
    %s706 = scalar_lea.vmem [#allocation2], 120
    %707 = vst [vmem:[%s706] sm:$0xff] %v660
    %708 = vst [vmem:[%s706 + $0x8] sm:$0xff] %v662
    %709 = vst [vmem:[%s706 + $0x10] sm:$0xff] %v701
    %s710 = scalar_lea.vmem [#allocation3], 24
    %v711 = vld [vmem:[%s710] sm:$0xf]
    %v713 = vsel %vm172, %v711, 0
    %715 = vmatprep.subr.bf16.mxu0 %v161
    %716 = vmatpush1.bf16.msra.mxu0 %v160
    %717 = vmatprep.subr.bf16.mxu0 %v164
    %718 = vmatpush1.bf16.msra.mxu0 %v163
    %719 = vmatprep.subr.bf16.mxu0 0
    %720 = vmatpush1.bf16.msra.mxu0 0
    %721 = vmatprep.subr.bf16.mxu0 0
    %722 = vmatpush1.bf16.msra.mxu0 0
    %723 = vmatprep.subr.bf16.mxu0 0
    %724 = vmatpush1.bf16.msra.mxu0 0
    %725 = vmatprep.subr.bf16.mxu0 0
    %726 = vmatpush1.bf16.msra.mxu0 0
    %727 = vmatprep.subr.bf16.mxu0 0
    %728 = vmatpush1.bf16.msra.mxu0 0
    %729 = vmatprep.subr.bf16.mxu0 0
    %730 = vmatpush1.bf16.msra.mxu0 0
    %731 = vmatprep.subr.bf16.mxu0 0
    %732 = vmatpush1.bf16.msra.mxu0 0
    %733 = vmatprep.subr.bf16.mxu0 0
    %734 = vmatpush1.bf16.msra.mxu0 0
    %735 = vmatprep.subr.bf16.mxu0 0
    %736 = vmatpush1.bf16.msra.mxu0 0
    %737 = vmatprep.subr.bf16.mxu0 0
    %738 = vmatpush1.bf16.msra.mxu0 0
    %739 = vmatprep.subr.bf16.mxu0 0
    %740 = vmatpush1.bf16.msra.mxu0 0
    %741 = vmatprep.subr.bf16.mxu0 0
    %742 = vmatpush1.bf16.msra.mxu0 0
    %743 = vmatprep.subr.bf16.mxu0 0
    %744 = vmatpush1.bf16.msra.mxu0 0
    %745 = vmatprep.subr.bf16.mxu0 0
    %746 = vmatpush1.bf16.msra.mxu0 0
    %747 = vmatprep.mubr.bf16.mxu0 0
    %748 = vmatmul.mubr.bf16.gmra.mrb[0].mxu0 %v713
    %v749 = vpop.f32.mrb[0].mxu0
    %v750 = vadd.f32 %v120, %v749
    %v751 = vpop.f32.mrb[0].mxu0
    %v752 = vadd.f32 %v124, %v751
    %v753 = vpop.f32.mrb[0].mxu0
    %v754 = vpop.f32.mrb[0].mxu0
    %755 = vdwg.mxu0
    %756 = vmatprep.subr.bf16.mxu0 0
    %757 = vmatpush1.bf16.msra.mxu0 %v162
    %758 = vmatprep.subr.bf16.mxu0 0
    %759 = vmatpush1.bf16.msra.mxu0 %v165
    %760 = vmatprep.subr.bf16.mxu0 0
    %761 = vmatpush1.bf16.msra.mxu0 0
    %762 = vmatprep.subr.bf16.mxu0 0
    %763 = vmatpush1.bf16.msra.mxu0 0
    %764 = vmatprep.subr.bf16.mxu0 0
    %765 = vmatpush1.bf16.msra.mxu0 0
    %766 = vmatprep.subr.bf16.mxu0 0
    %767 = vmatpush1.bf16.msra.mxu0 0
    %768 = vmatprep.subr.bf16.mxu0 0
    %769 = vmatpush1.bf16.msra.mxu0 0
    %770 = vmatprep.subr.bf16.mxu0 0
    %771 = vmatpush1.bf16.msra.mxu0 0
    %772 = vmatprep.subr.bf16.mxu0 0
    %773 = vmatpush1.bf16.msra.mxu0 0
    %774 = vmatprep.subr.bf16.mxu0 0
    %775 = vmatpush1.bf16.msra.mxu0 0
    %776 = vmatprep.subr.bf16.mxu0 0
    %777 = vmatpush1.bf16.msra.mxu0 0
    %778 = vmatprep.subr.bf16.mxu0 0
    %779 = vmatpush1.bf16.msra.mxu0 0
    %780 = vmatprep.subr.bf16.mxu0 0
    %781 = vmatpush1.bf16.msra.mxu0 0
    %782 = vmatprep.subr.bf16.mxu0 0
    %783 = vmatpush1.bf16.msra.mxu0 0
    %784 = vmatprep.subr.bf16.mxu0 0
    %785 = vmatpush1.bf16.msra.mxu0 0
    %786 = vmatprep.subr.bf16.mxu0 0
    %787 = vmatpush1.bf16.msra.mxu0 0
    %788 = vmatprep.mubr.bf16.mxu0 0
    %789 = vmatmul.mubr.bf16.gmra.mrb[0].mxu0 %v713
    %v790 = vpop.f32.mrb[0].mxu0
    %v791 = vadd.f32 %v128, %v790
    %v792 = vpop.f32.mrb[0].mxu0
    %v793 = vpop.f32.mrb[0].mxu0
    %v794 = vpop.f32.mrb[0].mxu0
    %795 = vdwg.mxu0
    %s796 = scalar_lea.vmem [#allocation2], 144
    %797 = vst [vmem:[%s796] sm:$0xff] %v750
    %798 = vst [vmem:[%s796 + $0x8] sm:$0xff] %v752
    %799 = vst [vmem:[%s796 + $0x10] sm:$0xff] %v791
    %s800 = scalar_lea.vmem [#allocation3], 28
    %v801 = vld [vmem:[%s800] sm:$0xf]
    %v803 = vsel %vm172, %v801, 0
    %805 = vmatprep.subr.bf16.mxu0 %v161
    %806 = vmatpush1.bf16.msra.mxu0 %v160
    %807 = vmatprep.subr.bf16.mxu0 %v164
    %808 = vmatpush1.bf16.msra.mxu0 %v163
    %809 = vmatprep.subr.bf16.mxu0 0
    %810 = vmatpush1.bf16.msra.mxu0 0
    %811 = vmatprep.subr.bf16.mxu0 0
    %812 = vmatpush1.bf16.msra.mxu0 0
    %813 = vmatprep.subr.bf16.mxu0 0
    %814 = vmatpush1.bf16.msra.mxu0 0
    %815 = vmatprep.subr.bf16.mxu0 0
    %816 = vmatpush1.bf16.msra.mxu0 0
    %817 = vmatprep.subr.bf16.mxu0 0
    %818 = vmatpush1.bf16.msra.mxu0 0
    %819 = vmatprep.subr.bf16.mxu0 0
    %820 = vmatpush1.bf16.msra.mxu0 0
    %821 = vmatprep.subr.bf16.mxu0 0
    %822 = vmatpush1.bf16.msra.mxu0 0
    %823 = vmatprep.subr.bf16.mxu0 0
    %824 = vmatpush1.bf16.msra.mxu0 0
    %825 = vmatprep.subr.bf16.mxu0 0
    %826 = vmatpush1.bf16.msra.mxu0 0
    %827 = vmatprep.subr.bf16.mxu0 0
    %828 = vmatpush1.bf16.msra.mxu0 0
    %829 = vmatprep.subr.bf16.mxu0 0
    %830 = vmatpush1.bf16.msra.mxu0 0
    %831 = vmatprep.subr.bf16.mxu0 0
    %832 = vmatpush1.bf16.msra.mxu0 0
    %833 = vmatprep.subr.bf16.mxu0 0
    %834 = vmatpush1.bf16.msra.mxu0 0
    %835 = vmatprep.subr.bf16.mxu0 0
    %836 = vmatpush1.bf16.msra.mxu0 0
    %837 = vmatprep.mubr.bf16.mxu0 0
    %838 = vmatmul.mubr.bf16.gmra.mrb[0].mxu0 %v803
    %v839 = vpop.f32.mrb[0].mxu0
    %v840 = vadd.f32 %v120, %v839
    %v841 = vpop.f32.mrb[0].mxu0
    %v842 = vadd.f32 %v124, %v841
    %v843 = vpop.f32.mrb[0].mxu0
    %v844 = vpop.f32.mrb[0].mxu0
    %845 = vdwg.mxu0
    %846 = vmatprep.subr.bf16.mxu0 0
    %847 = vmatpush1.bf16.msra.mxu0 %v162
    %848 = vmatprep.subr.bf16.mxu0 0
    %849 = vmatpush1.bf16.msra.mxu0 %v165
    %850 = vmatprep.subr.bf16.mxu0 0
    %851 = vmatpush1.bf16.msra.mxu0 0
    %852 = vmatprep.subr.bf16.mxu0 0
    %853 = vmatpush1.bf16.msra.mxu0 0
    %854 = vmatprep.subr.bf16.mxu0 0
    %855 = vmatpush1.bf16.msra.mxu0 0
    %856 = vmatprep.subr.bf16.mxu0 0
    %857 = vmatpush1.bf16.msra.mxu0 0
    %858 = vmatprep.subr.bf16.mxu0 0
    %859 = vmatpush1.bf16.msra.mxu0 0
    %860 = vmatprep.subr.bf16.mxu0 0
    %861 = vmatpush1.bf16.msra.mxu0 0
    %862 = vmatprep.subr.bf16.mxu0 0
    %863 = vmatpush1.bf16.msra.mxu0 0
    %864 = vmatprep.subr.bf16.mxu0 0
    %865 = vmatpush1.bf16.msra.mxu0 0
    %866 = vmatprep.subr.bf16.mxu0 0
    %867 = vmatpush1.bf16.msra.mxu0 0
    %868 = vmatprep.subr.bf16.mxu0 0
    %869 = vmatpush1.bf16.msra.mxu0 0
    %870 = vmatprep.subr.bf16.mxu0 0
    %871 = vmatpush1.bf16.msra.mxu0 0
    %872 = vmatprep.subr.bf16.mxu0 0
    %873 = vmatpush1.bf16.msra.mxu0 0
    %874 = vmatprep.subr.bf16.mxu0 0
    %875 = vmatpush1.bf16.msra.mxu0 0
    %876 = vmatprep.subr.bf16.mxu0 0
    %877 = vmatpush1.bf16.msra.mxu0 0
    %878 = vmatprep.mubr.bf16.mxu0 0
    %879 = vmatmul.mubr.bf16.gmra.mrb[0].mxu0 %v803
    %v880 = vpop.f32.mrb[0].mxu0
    %v881 = vadd.f32 %v128, %v880
    %v882 = vpop.f32.mrb[0].mxu0
    %v883 = vpop.f32.mrb[0].mxu0
    %v884 = vpop.f32.mrb[0].mxu0
    %885 = vdwg.mxu0
    %s886 = scalar_lea.vmem [#allocation2], 168
    %887 = vst [vmem:[%s886] sm:$0xff] %v840
    %888 = vst [vmem:[%s886 + $0x8] sm:$0xff] %v842
    %889 = vst [vmem:[%s886 + $0x10] sm:$0xff] %v881
    %v890 = vld [vmem:[#allocation10] sm:$0xff]
    %v891 = vld [vmem:[#allocation2] sm:$0xff]
    %v892 = vld [vmem:[#allocation2 + $0x8] sm:$0xff]
    %v893 = vld [vmem:[#allocation2 + $0x10] sm:$0xff]
    %v894 = vpack.c.bf16 %v890, %v890
    %v927 = vunpack.c.l.b16 %v83
    %v928 = vunpack.c.h.b16 %v83
    %v929 = vunpack.c.l.b16 %v84
    %v930 = vunpack.c.l.b16 %v85
    %v931 = vunpack.c.h.b16 %v85
    %v932 = vunpack.c.l.b16 %v86
    %v933 = vunpack.c.l.b16 %v87
    %v934 = vunpack.c.h.b16 %v87
    %v935 = vunpack.c.l.b16 %v88
    %v936 = vunpack.c.l.b16 %v89
    %v937 = vunpack.c.h.b16 %v89
    %v938 = vunpack.c.l.b16 %v90
    %v939 = vunpack.c.l.b16 %v91
    %v940 = vunpack.c.h.b16 %v91
    %v941 = vunpack.c.l.b16 %v92
    %v942 = vunpack.c.l.b16 %v93
    %v943 = vunpack.c.h.b16 %v93
    %v944 = vunpack.c.l.b16 %v94
    %v945 = vunpack.c.l.b16 %v95
    %v946 = vunpack.c.h.b16 %v95
    %v947 = vunpack.c.l.b16 %v96
    %v948 = vunpack.c.l.b16 %v97
    %v949 = vunpack.c.h.b16 %v97
    %v950 = vunpack.c.l.b16 %v98
    %v951 = vunpack.c.l.b16 %v99
    %v952 = vunpack.c.h.b16 %v99
    %v953 = vunpack.c.l.b16 %v100
    %v954 = vunpack.c.l.b16 %v101
    %v955 = vunpack.c.h.b16 %v101
    %v956 = vunpack.c.l.b16 %v102
    %v957 = vunpack.c.l.b16 %v103
    %v958 = vunpack.c.h.b16 %v103
    %v959 = vunpack.c.l.b16 %v104
    %v960 = vunpack.c.l.b16 %v105
    %v961 = vunpack.c.h.b16 %v105
    %v962 = vunpack.c.l.b16 %v106
    %v963 = vunpack.c.l.b16 %v107
    %v964 = vunpack.c.h.b16 %v107
    %v965 = vunpack.c.l.b16 %v108
    %v966 = vunpack.c.l.b16 %v109
    %v967 = vunpack.c.h.b16 %v109
    %v968 = vunpack.c.l.b16 %v110
    %v969 = vunpack.c.l.b16 %v111
    %v970 = vunpack.c.h.b16 %v111
    %v971 = vunpack.c.l.b16 %v112
    %v972 = vunpack.c.l.b16 %v113
    %v973 = vunpack.c.h.b16 %v113
    %v974 = vunpack.c.l.b16 %v114
    %v975 = vpack.c.b16 %v930, %v927
    %v976 = vpack.c.b16 %v931, %v928
    %v977 = vpack.c.b16 %v932, %v929
    %v978 = vpack.c.b16 %v936, %v933
    %v979 = vpack.c.b16 %v937, %v934
    %v980 = vpack.c.b16 %v938, %v935
    %v981 = vpack.c.b16 %v942, %v939
    %v982 = vpack.c.b16 %v943, %v940
    %v983 = vpack.c.b16 %v944, %v941
    %v984 = vpack.c.b16 %v948, %v945
    %v985 = vpack.c.b16 %v949, %v946
    %v986 = vpack.c.b16 %v950, %v947
    %v987 = vpack.c.b16 %v954, %v951
    %v988 = vpack.c.b16 %v955, %v952
    %v989 = vpack.c.b16 %v956, %v953
    %v990 = vpack.c.b16 %v960, %v957
    %v991 = vpack.c.b16 %v961, %v958
    %v992 = vpack.c.b16 %v962, %v959
    %v993 = vpack.c.b16 %v966, %v963
    %v994 = vpack.c.b16 %v967, %v964
    %v995 = vpack.c.b16 %v968, %v965
    %v996 = vpack.c.b16 %v972, %v969
    %v997 = vpack.c.b16 %v973, %v970
    %v998 = vpack.c.b16 %v974, %v971
    %1023 = vmatprep.subr.bf16.mxu0 %v976
    %1024 = vmatpush1.bf16.msra.mxu0 %v975
    %1025 = vmatprep.subr.bf16.mxu0 %v979
    %1026 = vmatpush1.bf16.msra.mxu0 %v978
    %1027 = vmatprep.subr.bf16.mxu0 %v982
    %1028 = vmatpush1.bf16.msra.mxu0 %v981
    %1029 = vmatprep.subr.bf16.mxu0 %v985
    %1030 = vmatpush1.bf16.msra.mxu0 %v984
    %1031 = vmatprep.subr.bf16.mxu0 %v988
    %1032 = vmatpush1.bf16.msra.mxu0 %v987
    %1033 = vmatprep.subr.bf16.mxu0 %v991
    %1034 = vmatpush1.bf16.msra.mxu0 %v990
    %1035 = vmatprep.subr.bf16.mxu0 %v994
    %1036 = vmatpush1.bf16.msra.mxu0 %v993
    %1037 = vmatprep.subr.bf16.mxu0 %v997
    %1038 = vmatpush1.bf16.msra.mxu0 %v996
    %1039 = vmatprep.subr.bf16.mxu0 0
    %1040 = vmatpush1.bf16.msra.mxu0 0
    %1041 = vmatprep.subr.bf16.mxu0 0
    %1042 = vmatpush1.bf16.msra.mxu0 0
    %1043 = vmatprep.subr.bf16.mxu0 0
    %1044 = vmatpush1.bf16.msra.mxu0 0
    %1045 = vmatprep.subr.bf16.mxu0 0
    %1046 = vmatpush1.bf16.msra.mxu0 0
    %1047 = vmatprep.subr.bf16.mxu0 0
    %1048 = vmatpush1.bf16.msra.mxu0 0
    %1049 = vmatprep.subr.bf16.mxu0 0
    %1050 = vmatpush1.bf16.msra.mxu0 0
    %1051 = vmatprep.subr.bf16.mxu0 0
    %1052 = vmatpush1.bf16.msra.mxu0 0
    %1053 = vmatprep.subr.bf16.mxu0 0
    %1054 = vmatpush1.bf16.msra.mxu0 0
    %1055 = vmatprep.mubr.bf16.mxu0 0
    %1056 = vmatmul.mubr.bf16.gmra.mrb[0].mxu0 %v894
    %v1057 = vpop.f32.mrb[0].mxu0
    %v1058 = vadd.f32 0.0, %v1057
    %v1059 = vpop.f32.mrb[0].mxu0
    %v1060 = vadd.f32 0.0, %v1059
    %v1061 = vpop.f32.mrb[0].mxu0
    %v1062 = vpop.f32.mrb[0].mxu0
    %1063 = vdwg.mxu0
    %1064 = vmatprep.subr.bf16.mxu0 0
    %1065 = vmatpush1.bf16.msra.mxu0 %v977
    %1066 = vmatprep.subr.bf16.mxu0 0
    %1067 = vmatpush1.bf16.msra.mxu0 %v980
    %1068 = vmatprep.subr.bf16.mxu0 0
    %1069 = vmatpush1.bf16.msra.mxu0 %v983
    %1070 = vmatprep.subr.bf16.mxu0 0
    %1071 = vmatpush1.bf16.msra.mxu0 %v986
    %1072 = vmatprep.subr.bf16.mxu0 0
    %1073 = vmatpush1.bf16.msra.mxu0 %v989
    %1074 = vmatprep.subr.bf16.mxu0 0
    %1075 = vmatpush1.bf16.msra.mxu0 %v992
    %1076 = vmatprep.subr.bf16.mxu0 0
    %1077 = vmatpush1.bf16.msra.mxu0 %v995
    %1078 = vmatprep.subr.bf16.mxu0 0
    %1079 = vmatpush1.bf16.msra.mxu0 %v998
    %1080 = vmatprep.subr.bf16.mxu0 0
    %1081 = vmatpush1.bf16.msra.mxu0 0
    %1082 = vmatprep.subr.bf16.mxu0 0
    %1083 = vmatpush1.bf16.msra.mxu0 0
    %1084 = vmatprep.subr.bf16.mxu0 0
    %1085 = vmatpush1.bf16.msra.mxu0 0
    %1086 = vmatprep.subr.bf16.mxu0 0
    %1087 = vmatpush1.bf16.msra.mxu0 0
    %1088 = vmatprep.subr.bf16.mxu0 0
    %1089 = vmatpush1.bf16.msra.mxu0 0
    %1090 = vmatprep.subr.bf16.mxu0 0
    %1091 = vmatpush1.bf16.msra.mxu0 0
    %1092 = vmatprep.subr.bf16.mxu0 0
    %1093 = vmatpush1.bf16.msra.mxu0 0
    %1094 = vmatprep.subr.bf16.mxu0 0
    %1095 = vmatpush1.bf16.msra.mxu0 0
    %1096 = vmatprep.mubr.bf16.mxu0 0
    %1097 = vmatmul.mubr.bf16.gmra.mrb[0].mxu0 %v894
    %v1098 = vpop.f32.mrb[0].mxu0
    %v1099 = vadd.f32 0.0, %v1098
    %v1100 = vpop.f32.mrb[0].mxu0
    %v1101 = vpop.f32.mrb[0].mxu0
    %v1102 = vpop.f32.mrb[0].mxu0
    %1103 = vdwg.mxu0
    %v1104 = vadd.f32 %v891, %v1058
    %v1105 = vxor.u32 %v1104, 2147483648
    %v1106 = vmul.f32 %v1105, 1.442695
    %v1107 = vpow.pop %v1106
    %v1108 = vadd.f32 %v1107, 1.0
    %v1109 = vrcp.pop %v1108
    %v1110 = vmul.f32 1.0, %v1109
    %v1111 = vadd.f32 %v892, %v1060
    %v1112 = vxor.u32 %v1111, 2147483648
    %v1113 = vmul.f32 %v1112, 1.442695
    %v1114 = vpow.pop %v1113
    %v1115 = vadd.f32 %v1114, 1.0
    %v1116 = vrcp.pop %v1115
    %v1117 = vmul.f32 1.0, %v1116
    %v1118 = vadd.f32 %v1099, %v137
    %v1119 = vmul.f32 %v1110, %v1118
    %v1120 = vadd.f32 %v893, %v1119
    %v1121 = vtanh.pop %v1120
    %v1122 = vsub.f32 1.0, %v1117
    %v1123 = vmul.f32 %v1122, %v1121
    %v1124 = vmul.f32 %v1117, %v890
    %v1125 = vadd.f32 %v1123, %v1124
    %1126 = vst [vmem:[#allocation9] sm:$0xff] %v1125
    %v1127 = vld [vmem:[%s346] sm:$0xff]
    %v1128 = vld [vmem:[%s346 + $0x8] sm:$0xff]
    %v1129 = vld [vmem:[%s346 + $0x10] sm:$0xff]
    %v1130 = vpack.c.bf16 %v1125, %v1125
    %1131 = vmatprep.subr.bf16.mxu0 %v976
    %1132 = vmatpush1.bf16.msra.mxu0 %v975
    %1133 = vmatprep.subr.bf16.mxu0 %v979
    %1134 = vmatpush1.bf16.msra.mxu0 %v978
    %1135 = vmatprep.subr.bf16.mxu0 %v982
    %1136 = vmatpush1.bf16.msra.mxu0 %v981
    %1137 = vmatprep.subr.bf16.mxu0 %v985
    %1138 = vmatpush1.bf16.msra.mxu0 %v984
    %1139 = vmatprep.subr.bf16.mxu0 %v988
    %1140 = vmatpush1.bf16.msra.mxu0 %v987
    %1141 = vmatprep.subr.bf16.mxu0 %v991
    %1142 = vmatpush1.bf16.msra.mxu0 %v990
    %1143 = vmatprep.subr.bf16.mxu0 %v994
    %1144 = vmatpush1.bf16.msra.mxu0 %v993
    %1145 = vmatprep.subr.bf16.mxu0 %v997
    %1146 = vmatpush1.bf16.msra.mxu0 %v996
    %1147 = vmatprep.subr.bf16.mxu0 0
    %1148 = vmatpush1.bf16.msra.mxu0 0
    %1149 = vmatprep.subr.bf16.mxu0 0
    %1150 = vmatpush1.bf16.msra.mxu0 0
    %1151 = vmatprep.subr.bf16.mxu0 0
    %1152 = vmatpush1.bf16.msra.mxu0 0
    %1153 = vmatprep.subr.bf16.mxu0 0
    %1154 = vmatpush1.bf16.msra.mxu0 0
    %1155 = vmatprep.subr.bf16.mxu0 0
    %1156 = vmatpush1.bf16.msra.mxu0 0
    %1157 = vmatprep.subr.bf16.mxu0 0
    %1158 = vmatpush1.bf16.msra.mxu0 0
    %1159 = vmatprep.subr.bf16.mxu0 0
    %1160 = vmatpush1.bf16.msra.mxu0 0
    %1161 = vmatprep.subr.bf16.mxu0 0
    %1162 = vmatpush1.bf16.msra.mxu0 0
    %1163 = vmatprep.mubr.bf16.mxu0 0
    %1164 = vmatmul.mubr.bf16.gmra.mrb[0].mxu0 %v1130
    %v1165 = vpop.f32.mrb[0].mxu0
    %v1166 = vadd.f32 0.0, %v1165
    %v1167 = vpop.f32.mrb[0].mxu0
    %v1168 = vadd.f32 0.0, %v1167
    %v1169 = vpop.f32.mrb[0].mxu0
    %v1170 = vpop.f32.mrb[0].mxu0
    %1171 = vdwg.mxu0
    %1172 = vmatprep.subr.bf16.mxu0 0
    %1173 = vmatpush1.bf16.msra.mxu0 %v977
    %1174 = vmatprep.subr.bf16.mxu0 0
    %1175 = vmatpush1.bf16.msra.mxu0 %v980
    %1176 = vmatprep.subr.bf16.mxu0 0
    %1177 = vmatpush1.bf16.msra.mxu0 %v983
    %1178 = vmatprep.subr.bf16.mxu0 0
    %1179 = vmatpush1.bf16.msra.mxu0 %v986
    %1180 = vmatprep.subr.bf16.mxu0 0
    %1181 = vmatpush1.bf16.msra.mxu0 %v989
    %1182 = vmatprep.subr.bf16.mxu0 0
    %1183 = vmatpush1.bf16.msra.mxu0 %v992
    %1184 = vmatprep.subr.bf16.mxu0 0
    %1185 = vmatpush1.bf16.msra.mxu0 %v995
    %1186 = vmatprep.subr.bf16.mxu0 0
    %1187 = vmatpush1.bf16.msra.mxu0 %v998
    %1188 = vmatprep.subr.bf16.mxu0 0
    %1189 = vmatpush1.bf16.msra.mxu0 0
    %1190 = vmatprep.subr.bf16.mxu0 0
    %1191 = vmatpush1.bf16.msra.mxu0 0
    %1192 = vmatprep.subr.bf16.mxu0 0
    %1193 = vmatpush1.bf16.msra.mxu0 0
    %1194 = vmatprep.subr.bf16.mxu0 0
    %1195 = vmatpush1.bf16.msra.mxu0 0
    %1196 = vmatprep.subr.bf16.mxu0 0
    %1197 = vmatpush1.bf16.msra.mxu0 0
    %1198 = vmatprep.subr.bf16.mxu0 0
    %1199 = vmatpush1.bf16.msra.mxu0 0
    %1200 = vmatprep.subr.bf16.mxu0 0
    %1201 = vmatpush1.bf16.msra.mxu0 0
    %1202 = vmatprep.subr.bf16.mxu0 0
    %1203 = vmatpush1.bf16.msra.mxu0 0
    %1204 = vmatprep.mubr.bf16.mxu0 0
    %1205 = vmatmul.mubr.bf16.gmra.mrb[0].mxu0 %v1130
    %v1206 = vpop.f32.mrb[0].mxu0
    %v1207 = vadd.f32 0.0, %v1206
    %v1208 = vpop.f32.mrb[0].mxu0
    %v1209 = vpop.f32.mrb[0].mxu0
    %v1210 = vpop.f32.mrb[0].mxu0
    %1211 = vdwg.mxu0
    %v1212 = vadd.f32 %v1127, %v1166
    %v1213 = vxor.u32 %v1212, 2147483648
    %v1214 = vmul.f32 %v1213, 1.442695
    %v1215 = vpow.pop %v1214
    %v1216 = vadd.f32 %v1215, 1.0
    %v1217 = vrcp.pop %v1216
    %v1218 = vmul.f32 1.0, %v1217
    %v1219 = vadd.f32 %v1128, %v1168
    %v1220 = vxor.u32 %v1219, 2147483648
    %v1221 = vmul.f32 %v1220, 1.442695
    %v1222 = vpow.pop %v1221
    %v1223 = vadd.f32 %v1222, 1.0
    %v1224 = vrcp.pop %v1223
    %v1225 = vmul.f32 1.0, %v1224
    %v1226 = vadd.f32 %v1207, %v137
    %v1227 = vmul.f32 %v1218, %v1226
    %v1228 = vadd.f32 %v1129, %v1227
    %v1229 = vtanh.pop %v1228
    %v1230 = vsub.f32 1.0, %v1225
    %v1231 = vmul.f32 %v1230, %v1229
    %v1232 = vmul.f32 %v1225, %v1125
    %v1233 = vadd.f32 %v1231, %v1232
    %s1234 = scalar_lea.vmem [#allocation9], 8
    %1235 = vst [vmem:[%s1234] sm:$0xff] %v1233
    %v1236 = vld [vmem:[%s436] sm:$0xff]
    %v1237 = vld [vmem:[%s436 + $0x8] sm:$0xff]
    %v1238 = vld [vmem:[%s436 + $0x10] sm:$0xff]
    %v1239 = vpack.c.bf16 %v1233, %v1233
    %1240 = vmatprep.subr.bf16.mxu0 %v976
    %1241 = vmatpush1.bf16.msra.mxu0 %v975
    %1242 = vmatprep.subr.bf16.mxu0 %v979
    %1243 = vmatpush1.bf16.msra.mxu0 %v978
    %1244 = vmatprep.subr.bf16.mxu0 %v982
    %1245 = vmatpush1.bf16.msra.mxu0 %v981
    %1246 = vmatprep.subr.bf16.mxu0 %v985
    %1247 = vmatpush1.bf16.msra.mxu0 %v984
    %1248 = vmatprep.subr.bf16.mxu0 %v988
    %1249 = vmatpush1.bf16.msra.mxu0 %v987
    %1250 = vmatprep.subr.bf16.mxu0 %v991
    %1251 = vmatpush1.bf16.msra.mxu0 %v990
    %1252 = vmatprep.subr.bf16.mxu0 %v994
    %1253 = vmatpush1.bf16.msra.mxu0 %v993
    %1254 = vmatprep.subr.bf16.mxu0 %v997
    %1255 = vmatpush1.bf16.msra.mxu0 %v996
    %1256 = vmatprep.subr.bf16.mxu0 0
    %1257 = vmatpush1.bf16.msra.mxu0 0
    %1258 = vmatprep.subr.bf16.mxu0 0
    %1259 = vmatpush1.bf16.msra.mxu0 0
    %1260 = vmatprep.subr.bf16.mxu0 0
    %1261 = vmatpush1.bf16.msra.mxu0 0
    %1262 = vmatprep.subr.bf16.mxu0 0
    %1263 = vmatpush1.bf16.msra.mxu0 0
    %1264 = vmatprep.subr.bf16.mxu0 0
    %1265 = vmatpush1.bf16.msra.mxu0 0
    %1266 = vmatprep.subr.bf16.mxu0 0
    %1267 = vmatpush1.bf16.msra.mxu0 0
    %1268 = vmatprep.subr.bf16.mxu0 0
    %1269 = vmatpush1.bf16.msra.mxu0 0
    %1270 = vmatprep.subr.bf16.mxu0 0
    %1271 = vmatpush1.bf16.msra.mxu0 0
    %1272 = vmatprep.mubr.bf16.mxu0 0
    %1273 = vmatmul.mubr.bf16.gmra.mrb[0].mxu0 %v1239
    %v1274 = vpop.f32.mrb[0].mxu0
    %v1275 = vadd.f32 0.0, %v1274
    %v1276 = vpop.f32.mrb[0].mxu0
    %v1277 = vadd.f32 0.0, %v1276
    %v1278 = vpop.f32.mrb[0].mxu0
    %v1279 = vpop.f32.mrb[0].mxu0
    %1280 = vdwg.mxu0
    %1281 = vmatprep.subr.bf16.mxu0 0
    %1282 = vmatpush1.bf16.msra.mxu0 %v977
    %1283 = vmatprep.subr.bf16.mxu0 0
    %1284 = vmatpush1.bf16.msra.mxu0 %v980
    %1285 = vmatprep.subr.bf16.mxu0 0
    %1286 = vmatpush1.bf16.msra.mxu0 %v983
    %1287 = vmatprep.subr.bf16.mxu0 0
    %1288 = vmatpush1.bf16.msra.mxu0 %v986
    %1289 = vmatprep.subr.bf16.mxu0 0
    %1290 = vmatpush1.bf16.msra.mxu0 %v989
    %1291 = vmatprep.subr.bf16.mxu0 0
    %1292 = vmatpush1.bf16.msra.mxu0 %v992
    %1293 = vmatprep.subr.bf16.mxu0 0
    %1294 = vmatpush1.bf16.msra.mxu0 %v995
    %1295 = vmatprep.subr.bf16.mxu0 0
    %1296 = vmatpush1.bf16.msra.mxu0 %v998
    %1297 = vmatprep.subr.bf16.mxu0 0
    %1298 = vmatpush1.bf16.msra.mxu0 0
    %1299 = vmatprep.subr.bf16.mxu0 0
    %1300 = vmatpush1.bf16.msra.mxu0 0
    %1301 = vmatprep.subr.bf16.mxu0 0
    %1302 = vmatpush1.bf16.msra.mxu0 0
    %1303 = vmatprep.subr.bf16.mxu0 0
    %1304 = vmatpush1.bf16.msra.mxu0 0
    %1305 = vmatprep.subr.bf16.mxu0 0
    %1306 = vmatpush1.bf16.msra.mxu0 0
    %1307 = vmatprep.subr.bf16.mxu0 0
    %1308 = vmatpush1.bf16.msra.mxu0 0
    %1309 = vmatprep.subr.bf16.mxu0 0
    %1310 = vmatpush1.bf16.msra.mxu0 0
    %1311 = vmatprep.subr.bf16.mxu0 0
    %1312 = vmatpush1.bf16.msra.mxu0 0
    %1313 = vmatprep.mubr.bf16.mxu0 0
    %1314 = vmatmul.mubr.bf16.gmra.mrb[0].mxu0 %v1239
    %v1315 = vpop.f32.mrb[0].mxu0
    %v1316 = vadd.f32 0.0, %v1315
    %v1317 = vpop.f32.mrb[0].mxu0
    %v1318 = vpop.f32.mrb[0].mxu0
    %v1319 = vpop.f32.mrb[0].mxu0
    %1320 = vdwg.mxu0
    %v1321 = vadd.f32 %v1236, %v1275
    %v1322 = vxor.u32 %v1321, 2147483648
    %v1323 = vmul.f32 %v1322, 1.442695
    %v1324 = vpow.pop %v1323
    %v1325 = vadd.f32 %v1324, 1.0
    %v1326 = vrcp.pop %v1325
    %v1327 = vmul.f32 1.0, %v1326
    %v1328 = vadd.f32 %v1237, %v1277
    %v1329 = vxor.u32 %v1328, 2147483648
    %v1330 = vmul.f32 %v1329, 1.442695
    %v1331 = vpow.pop %v1330
    %v1332 = vadd.f32 %v1331, 1.0
    %v1333 = vrcp.pop %v1332
    %v1334 = vmul.f32 1.0, %v1333
    %v1335 = vadd.f32 %v1316, %v137
    %v1336 = vmul.f32 %v1327, %v1335
    %v1337 = vadd.f32 %v1238, %v1336
    %v1338 = vtanh.pop %v1337
    %v1339 = vsub.f32 1.0, %v1334
    %v1340 = vmul.f32 %v1339, %v1338
    %v1341 = vmul.f32 %v1334, %v1233
    %v1342 = vadd.f32 %v1340, %v1341
    %s1343 = scalar_lea.vmem [#allocation9], 16
    %1344 = vst [vmem:[%s1343] sm:$0xff] %v1342
    %v1345 = vld [vmem:[%s526] sm:$0xff]
    %v1346 = vld [vmem:[%s526 + $0x8] sm:$0xff]
    %v1347 = vld [vmem:[%s526 + $0x10] sm:$0xff]
    %v1348 = vpack.c.bf16 %v1342, %v1342
    %1349 = vmatprep.subr.bf16.mxu0 %v976
    %1350 = vmatpush1.bf16.msra.mxu0 %v975
    %1351 = vmatprep.subr.bf16.mxu0 %v979
    %1352 = vmatpush1.bf16.msra.mxu0 %v978
    %1353 = vmatprep.subr.bf16.mxu0 %v982
    %1354 = vmatpush1.bf16.msra.mxu0 %v981
    %1355 = vmatprep.subr.bf16.mxu0 %v985
    %1356 = vmatpush1.bf16.msra.mxu0 %v984
    %1357 = vmatprep.subr.bf16.mxu0 %v988
    %1358 = vmatpush1.bf16.msra.mxu0 %v987
    %1359 = vmatprep.subr.bf16.mxu0 %v991
    %1360 = vmatpush1.bf16.msra.mxu0 %v990
    %1361 = vmatprep.subr.bf16.mxu0 %v994
    %1362 = vmatpush1.bf16.msra.mxu0 %v993
    %1363 = vmatprep.subr.bf16.mxu0 %v997
    %1364 = vmatpush1.bf16.msra.mxu0 %v996
    %1365 = vmatprep.subr.bf16.mxu0 0
    %1366 = vmatpush1.bf16.msra.mxu0 0
    %1367 = vmatprep.subr.bf16.mxu0 0
    %1368 = vmatpush1.bf16.msra.mxu0 0
    %1369 = vmatprep.subr.bf16.mxu0 0
    %1370 = vmatpush1.bf16.msra.mxu0 0
    %1371 = vmatprep.subr.bf16.mxu0 0
    %1372 = vmatpush1.bf16.msra.mxu0 0
    %1373 = vmatprep.subr.bf16.mxu0 0
    %1374 = vmatpush1.bf16.msra.mxu0 0
    %1375 = vmatprep.subr.bf16.mxu0 0
    %1376 = vmatpush1.bf16.msra.mxu0 0
    %1377 = vmatprep.subr.bf16.mxu0 0
    %1378 = vmatpush1.bf16.msra.mxu0 0
    %1379 = vmatprep.subr.bf16.mxu0 0
    %1380 = vmatpush1.bf16.msra.mxu0 0
    %1381 = vmatprep.mubr.bf16.mxu0 0
    %1382 = vmatmul.mubr.bf16.gmra.mrb[0].mxu0 %v1348
    %v1383 = vpop.f32.mrb[0].mxu0
    %v1384 = vadd.f32 0.0, %v1383
    %v1385 = vpop.f32.mrb[0].mxu0
    %v1386 = vadd.f32 0.0, %v1385
    %v1387 = vpop.f32.mrb[0].mxu0
    %v1388 = vpop.f32.mrb[0].mxu0
    %1389 = vdwg.mxu0
    %1390 = vmatprep.subr.bf16.mxu0 0
    %1391 = vmatpush1.bf16.msra.mxu0 %v977
    %1392 = vmatprep.subr.bf16.mxu0 0
    %1393 = vmatpush1.bf16.msra.mxu0 %v980
    %1394 = vmatprep.subr.bf16.mxu0 0
    %1395 = vmatpush1.bf16.msra.mxu0 %v983
    %1396 = vmatprep.subr.bf16.mxu0 0
    %1397 = vmatpush1.bf16.msra.mxu0 %v986
    %1398 = vmatprep.subr.bf16.mxu0 0
    %1399 = vmatpush1.bf16.msra.mxu0 %v989
    %1400 = vmatprep.subr.bf16.mxu0 0
    %1401 = vmatpush1.bf16.msra.mxu0 %v992
    %1402 = vmatprep.subr.bf16.mxu0 0
    %1403 = vmatpush1.bf16.msra.mxu0 %v995
    %1404 = vmatprep.subr.bf16.mxu0 0
    %1405 = vmatpush1.bf16.msra.mxu0 %v998
    %1406 = vmatprep.subr.bf16.mxu0 0
    %1407 = vmatpush1.bf16.msra.mxu0 0
    %1408 = vmatprep.subr.bf16.mxu0 0
    %1409 = vmatpush1.bf16.msra.mxu0 0
    %1410 = vmatprep.subr.bf16.mxu0 0
    %1411 = vmatpush1.bf16.msra.mxu0 0
    %1412 = vmatprep.subr.bf16.mxu0 0
    %1413 = vmatpush1.bf16.msra.mxu0 0
    %1414 = vmatprep.subr.bf16.mxu0 0
    %1415 = vmatpush1.bf16.msra.mxu0 0
    %1416 = vmatprep.subr.bf16.mxu0 0
    %1417 = vmatpush1.bf16.msra.mxu0 0
    %1418 = vmatprep.subr.bf16.mxu0 0
    %1419 = vmatpush1.bf16.msra.mxu0 0
    %1420 = vmatprep.subr.bf16.mxu0 0
    %1421 = vmatpush1.bf16.msra.mxu0 0
    %1422 = vmatprep.mubr.bf16.mxu0 0
    %1423 = vmatmul.mubr.bf16.gmra.mrb[0].mxu0 %v1348
    %v1424 = vpop.f32.mrb[0].mxu0
    %v1425 = vadd.f32 0.0, %v1424
    %v1426 = vpop.f32.mrb[0].mxu0
    %v1427 = vpop.f32.mrb[0].mxu0
    %v1428 = vpop.f32.mrb[0].mxu0
    %1429 = vdwg.mxu0
    %v1430 = vadd.f32 %v1345, %v1384
    %v1431 = vxor.u32 %v1430, 2147483648
    %v1432 = vmul.f32 %v1431, 1.442695
    %v1433 = vpow.pop %v1432
    %v1434 = vadd.f32 %v1433, 1.0
    %v1435 = vrcp.pop %v1434
    %v1436 = vmul.f32 1.0, %v1435
    %v1437 = vadd.f32 %v1346, %v1386
    %v1438 = vxor.u32 %v1437, 2147483648
    %v1439 = vmul.f32 %v1438, 1.442695
    %v1440 = vpow.pop %v1439
    %v1441 = vadd.f32 %v1440, 1.0
    %v1442 = vrcp.pop %v1441
    %v1443 = vmul.f32 1.0, %v1442
    %v1444 = vadd.f32 %v1425, %v137
    %v1445 = vmul.f32 %v1436, %v1444
    %v1446 = vadd.f32 %v1347, %v1445
    %v1447 = vtanh.pop %v1446
    %v1448 = vsub.f32 1.0, %v1443
    %v1449 = vmul.f32 %v1448, %v1447
    %v1450 = vmul.f32 %v1443, %v1342
    %v1451 = vadd.f32 %v1449, %v1450
    %s1452 = scalar_lea.vmem [#allocation9], 24
    %1453 = vst [vmem:[%s1452] sm:$0xff] %v1451
    %v1454 = vld [vmem:[%s616] sm:$0xff]
    %v1455 = vld [vmem:[%s616 + $0x8] sm:$0xff]
    %v1456 = vld [vmem:[%s616 + $0x10] sm:$0xff]
    %v1457 = vpack.c.bf16 %v1451, %v1451
    %1458 = vmatprep.subr.bf16.mxu0 %v976
    %1459 = vmatpush1.bf16.msra.mxu0 %v975
    %1460 = vmatprep.subr.bf16.mxu0 %v979
    %1461 = vmatpush1.bf16.msra.mxu0 %v978
    %1462 = vmatprep.subr.bf16.mxu0 %v982
    %1463 = vmatpush1.bf16.msra.mxu0 %v981
    %1464 = vmatprep.subr.bf16.mxu0 %v985
    %1465 = vmatpush1.bf16.msra.mxu0 %v984
    %1466 = vmatprep.subr.bf16.mxu0 %v988
    %1467 = vmatpush1.bf16.msra.mxu0 %v987
    %1468 = vmatprep.subr.bf16.mxu0 %v991
    %1469 = vmatpush1.bf16.msra.mxu0 %v990
    %1470 = vmatprep.subr.bf16.mxu0 %v994
    %1471 = vmatpush1.bf16.msra.mxu0 %v993
    %1472 = vmatprep.subr.bf16.mxu0 %v997
    %1473 = vmatpush1.bf16.msra.mxu0 %v996
    %1474 = vmatprep.subr.bf16.mxu0 0
    %1475 = vmatpush1.bf16.msra.mxu0 0
    %1476 = vmatprep.subr.bf16.mxu0 0
    %1477 = vmatpush1.bf16.msra.mxu0 0
    %1478 = vmatprep.subr.bf16.mxu0 0
    %1479 = vmatpush1.bf16.msra.mxu0 0
    %1480 = vmatprep.subr.bf16.mxu0 0
    %1481 = vmatpush1.bf16.msra.mxu0 0
    %1482 = vmatprep.subr.bf16.mxu0 0
    %1483 = vmatpush1.bf16.msra.mxu0 0
    %1484 = vmatprep.subr.bf16.mxu0 0
    %1485 = vmatpush1.bf16.msra.mxu0 0
    %1486 = vmatprep.subr.bf16.mxu0 0
    %1487 = vmatpush1.bf16.msra.mxu0 0
    %1488 = vmatprep.subr.bf16.mxu0 0
    %1489 = vmatpush1.bf16.msra.mxu0 0
    %1490 = vmatprep.mubr.bf16.mxu0 0
    %1491 = vmatmul.mubr.bf16.gmra.mrb[0].mxu0 %v1457
    %v1492 = vpop.f32.mrb[0].mxu0
    %v1493 = vadd.f32 0.0, %v1492
    %v1494 = vpop.f32.mrb[0].mxu0
    %v1495 = vadd.f32 0.0, %v1494
    %v1496 = vpop.f32.mrb[0].mxu0
    %v1497 = vpop.f32.mrb[0].mxu0
    %1498 = vdwg.mxu0
    %1499 = vmatprep.subr.bf16.mxu0 0
    %1500 = vmatpush1.bf16.msra.mxu0 %v977
    %1501 = vmatprep.subr.bf16.mxu0 0
    %1502 = vmatpush1.bf16.msra.mxu0 %v980
    %1503 = vmatprep.subr.bf16.mxu0 0
    %1504 = vmatpush1.bf16.msra.mxu0 %v983
    %1505 = vmatprep.subr.bf16.mxu0 0
    %1506 = vmatpush1.bf16.msra.mxu0 %v986
    %1507 = vmatprep.subr.bf16.mxu0 0
    %1508 = vmatpush1.bf16.msra.mxu0 %v989
    %1509 = vmatprep.subr.bf16.mxu0 0
    %1510 = vmatpush1.bf16.msra.mxu0 %v992
    %1511 = vmatprep.subr.bf16.mxu0 0
    %1512 = vmatpush1.bf16.msra.mxu0 %v995
    %1513 = vmatprep.subr.bf16.mxu0 0
    %1514 = vmatpush1.bf16.msra.mxu0 %v998
    %1515 = vmatprep.subr.bf16.mxu0 0
    %1516 = vmatpush1.bf16.msra.mxu0 0
    %1517 = vmatprep.subr.bf16.mxu0 0
    %1518 = vmatpush1.bf16.msra.mxu0 0
    %1519 = vmatprep.subr.bf16.mxu0 0
    %1520 = vmatpush1.bf16.msra.mxu0 0
    %1521 = vmatprep.subr.bf16.mxu0 0
    %1522 = vmatpush1.bf16.msra.mxu0 0
    %1523 = vmatprep.subr.bf16.mxu0 0
    %1524 = vmatpush1.bf16.msra.mxu0 0
    %1525 = vmatprep.subr.bf16.mxu0 0
    %1526 = vmatpush1.bf16.msra.mxu0 0
    %1527 = vmatprep.subr.bf16.mxu0 0
    %1528 = vmatpush1.bf16.msra.mxu0 0
    %1529 = vmatprep.subr.bf16.mxu0 0
    %1530 = vmatpush1.bf16.msra.mxu0 0
    %1531 = vmatprep.mubr.bf16.mxu0 0
    %1532 = vmatmul.mubr.bf16.gmra.mrb[0].mxu0 %v1457
    %v1533 = vpop.f32.mrb[0].mxu0
    %v1534 = vadd.f32 0.0, %v1533
    %v1535 = vpop.f32.mrb[0].mxu0
    %v1536 = vpop.f32.mrb[0].mxu0
    %v1537 = vpop.f32.mrb[0].mxu0
    %1538 = vdwg.mxu0
    %v1539 = vadd.f32 %v1454, %v1493
    %v1540 = vxor.u32 %v1539, 2147483648
    %v1541 = vmul.f32 %v1540, 1.442695
    %v1542 = vpow.pop %v1541
    %v1543 = vadd.f32 %v1542, 1.0
    %v1544 = vrcp.pop %v1543
    %v1545 = vmul.f32 1.0, %v1544
    %v1546 = vadd.f32 %v1455, %v1495
    %v1547 = vxor.u32 %v1546, 2147483648
    %v1548 = vmul.f32 %v1547, 1.442695
    %v1549 = vpow.pop %v1548
    %v1550 = vadd.f32 %v1549, 1.0
    %v1551 = vrcp.pop %v1550
    %v1552 = vmul.f32 1.0, %v1551
    %v1553 = vadd.f32 %v1534, %v137
    %v1554 = vmul.f32 %v1545, %v1553
    %v1555 = vadd.f32 %v1456, %v1554
    %v1556 = vtanh.pop %v1555
    %v1557 = vsub.f32 1.0, %v1552
    %v1558 = vmul.f32 %v1557, %v1556
    %v1559 = vmul.f32 %v1552, %v1451
    %v1560 = vadd.f32 %v1558, %v1559
    %s1561 = scalar_lea.vmem [#allocation9], 32
    %1562 = vst [vmem:[%s1561] sm:$0xff] %v1560
    %v1563 = vld [vmem:[%s706] sm:$0xff]
    %v1564 = vld [vmem:[%s706 + $0x8] sm:$0xff]
    %v1565 = vld [vmem:[%s706 + $0x10] sm:$0xff]
    %v1566 = vpack.c.bf16 %v1560, %v1560
    %1567 = vmatprep.subr.bf16.mxu0 %v976
    %1568 = vmatpush1.bf16.msra.mxu0 %v975
    %1569 = vmatprep.subr.bf16.mxu0 %v979
    %1570 = vmatpush1.bf16.msra.mxu0 %v978
    %1571 = vmatprep.subr.bf16.mxu0 %v982
    %1572 = vmatpush1.bf16.msra.mxu0 %v981
    %1573 = vmatprep.subr.bf16.mxu0 %v985
    %1574 = vmatpush1.bf16.msra.mxu0 %v984
    %1575 = vmatprep.subr.bf16.mxu0 %v988
    %1576 = vmatpush1.bf16.msra.mxu0 %v987
    %1577 = vmatprep.subr.bf16.mxu0 %v991
    %1578 = vmatpush1.bf16.msra.mxu0 %v990
    %1579 = vmatprep.subr.bf16.mxu0 %v994
    %1580 = vmatpush1.bf16.msra.mxu0 %v993
    %1581 = vmatprep.subr.bf16.mxu0 %v997
    %1582 = vmatpush1.bf16.msra.mxu0 %v996
    %1583 = vmatprep.subr.bf16.mxu0 0
    %1584 = vmatpush1.bf16.msra.mxu0 0
    %1585 = vmatprep.subr.bf16.mxu0 0
    %1586 = vmatpush1.bf16.msra.mxu0 0
    %1587 = vmatprep.subr.bf16.mxu0 0
    %1588 = vmatpush1.bf16.msra.mxu0 0
    %1589 = vmatprep.subr.bf16.mxu0 0
    %1590 = vmatpush1.bf16.msra.mxu0 0
    %1591 = vmatprep.subr.bf16.mxu0 0
    %1592 = vmatpush1.bf16.msra.mxu0 0
    %1593 = vmatprep.subr.bf16.mxu0 0
    %1594 = vmatpush1.bf16.msra.mxu0 0
    %1595 = vmatprep.subr.bf16.mxu0 0
    %1596 = vmatpush1.bf16.msra.mxu0 0
    %1597 = vmatprep.subr.bf16.mxu0 0
    %1598 = vmatpush1.bf16.msra.mxu0 0
    %1599 = vmatprep.mubr.bf16.mxu0 0
    %1600 = vmatmul.mubr.bf16.gmra.mrb[0].mxu0 %v1566
    %v1601 = vpop.f32.mrb[0].mxu0
    %v1602 = vadd.f32 0.0, %v1601
    %v1603 = vpop.f32.mrb[0].mxu0
    %v1604 = vadd.f32 0.0, %v1603
    %v1605 = vpop.f32.mrb[0].mxu0
    %v1606 = vpop.f32.mrb[0].mxu0
    %1607 = vdwg.mxu0
    %1608 = vmatprep.subr.bf16.mxu0 0
    %1609 = vmatpush1.bf16.msra.mxu0 %v977
    %1610 = vmatprep.subr.bf16.mxu0 0
    %1611 = vmatpush1.bf16.msra.mxu0 %v980
    %1612 = vmatprep.subr.bf16.mxu0 0
    %1613 = vmatpush1.bf16.msra.mxu0 %v983
    %1614 = vmatprep.subr.bf16.mxu0 0
    %1615 = vmatpush1.bf16.msra.mxu0 %v986
    %1616 = vmatprep.subr.bf16.mxu0 0
    %1617 = vmatpush1.bf16.msra.mxu0 %v989
    %1618 = vmatprep.subr.bf16.mxu0 0
    %1619 = vmatpush1.bf16.msra.mxu0 %v992
    %1620 = vmatprep.subr.bf16.mxu0 0
    %1621 = vmatpush1.bf16.msra.mxu0 %v995
    %1622 = vmatprep.subr.bf16.mxu0 0
    %1623 = vmatpush1.bf16.msra.mxu0 %v998
    %1624 = vmatprep.subr.bf16.mxu0 0
    %1625 = vmatpush1.bf16.msra.mxu0 0
    %1626 = vmatprep.subr.bf16.mxu0 0
    %1627 = vmatpush1.bf16.msra.mxu0 0
    %1628 = vmatprep.subr.bf16.mxu0 0
    %1629 = vmatpush1.bf16.msra.mxu0 0
    %1630 = vmatprep.subr.bf16.mxu0 0
    %1631 = vmatpush1.bf16.msra.mxu0 0
    %1632 = vmatprep.subr.bf16.mxu0 0
    %1633 = vmatpush1.bf16.msra.mxu0 0
    %1634 = vmatprep.subr.bf16.mxu0 0
    %1635 = vmatpush1.bf16.msra.mxu0 0
    %1636 = vmatprep.subr.bf16.mxu0 0
    %1637 = vmatpush1.bf16.msra.mxu0 0
    %1638 = vmatprep.subr.bf16.mxu0 0
    %1639 = vmatpush1.bf16.msra.mxu0 0
    %1640 = vmatprep.mubr.bf16.mxu0 0
    %1641 = vmatmul.mubr.bf16.gmra.mrb[0].mxu0 %v1566
    %v1642 = vpop.f32.mrb[0].mxu0
    %v1643 = vadd.f32 0.0, %v1642
    %v1644 = vpop.f32.mrb[0].mxu0
    %v1645 = vpop.f32.mrb[0].mxu0
    %v1646 = vpop.f32.mrb[0].mxu0
    %1647 = vdwg.mxu0
    %v1648 = vadd.f32 %v1563, %v1602
    %v1649 = vxor.u32 %v1648, 2147483648
    %v1650 = vmul.f32 %v1649, 1.442695
    %v1651 = vpow.pop %v1650
    %v1652 = vadd.f32 %v1651, 1.0
    %v1653 = vrcp.pop %v1652
    %v1654 = vmul.f32 1.0, %v1653
    %v1655 = vadd.f32 %v1564, %v1604
    %v1656 = vxor.u32 %v1655, 2147483648
    %v1657 = vmul.f32 %v1656, 1.442695
    %v1658 = vpow.pop %v1657
    %v1659 = vadd.f32 %v1658, 1.0
    %v1660 = vrcp.pop %v1659
    %v1661 = vmul.f32 1.0, %v1660
    %v1662 = vadd.f32 %v1643, %v137
    %v1663 = vmul.f32 %v1654, %v1662
    %v1664 = vadd.f32 %v1565, %v1663
    %v1665 = vtanh.pop %v1664
    %v1666 = vsub.f32 1.0, %v1661
    %v1667 = vmul.f32 %v1666, %v1665
    %v1668 = vmul.f32 %v1661, %v1560
    %v1669 = vadd.f32 %v1667, %v1668
    %s1670 = scalar_lea.vmem [#allocation9], 40
    %1671 = vst [vmem:[%s1670] sm:$0xff] %v1669
    %v1672 = vld [vmem:[%s796] sm:$0xff]
    %v1673 = vld [vmem:[%s796 + $0x8] sm:$0xff]
    %v1674 = vld [vmem:[%s796 + $0x10] sm:$0xff]
    %v1675 = vpack.c.bf16 %v1669, %v1669
    %1676 = vmatprep.subr.bf16.mxu0 %v976
    %1677 = vmatpush1.bf16.msra.mxu0 %v975
    %1678 = vmatprep.subr.bf16.mxu0 %v979
    %1679 = vmatpush1.bf16.msra.mxu0 %v978
    %1680 = vmatprep.subr.bf16.mxu0 %v982
    %1681 = vmatpush1.bf16.msra.mxu0 %v981
    %1682 = vmatprep.subr.bf16.mxu0 %v985
    %1683 = vmatpush1.bf16.msra.mxu0 %v984
    %1684 = vmatprep.subr.bf16.mxu0 %v988
    %1685 = vmatpush1.bf16.msra.mxu0 %v987
    %1686 = vmatprep.subr.bf16.mxu0 %v991
    %1687 = vmatpush1.bf16.msra.mxu0 %v990
    %1688 = vmatprep.subr.bf16.mxu0 %v994
    %1689 = vmatpush1.bf16.msra.mxu0 %v993
    %1690 = vmatprep.subr.bf16.mxu0 %v997
    %1691 = vmatpush1.bf16.msra.mxu0 %v996
    %1692 = vmatprep.subr.bf16.mxu0 0
    %1693 = vmatpush1.bf16.msra.mxu0 0
    %1694 = vmatprep.subr.bf16.mxu0 0
    %1695 = vmatpush1.bf16.msra.mxu0 0
    %1696 = vmatprep.subr.bf16.mxu0 0
    %1697 = vmatpush1.bf16.msra.mxu0 0
    %1698 = vmatprep.subr.bf16.mxu0 0
    %1699 = vmatpush1.bf16.msra.mxu0 0
    %1700 = vmatprep.subr.bf16.mxu0 0
    %1701 = vmatpush1.bf16.msra.mxu0 0
    %1702 = vmatprep.subr.bf16.mxu0 0
    %1703 = vmatpush1.bf16.msra.mxu0 0
    %1704 = vmatprep.subr.bf16.mxu0 0
    %1705 = vmatpush1.bf16.msra.mxu0 0
    %1706 = vmatprep.subr.bf16.mxu0 0
    %1707 = vmatpush1.bf16.msra.mxu0 0
    %1708 = vmatprep.mubr.bf16.mxu0 0
    %1709 = vmatmul.mubr.bf16.gmra.mrb[0].mxu0 %v1675
    %v1710 = vpop.f32.mrb[0].mxu0
    %v1711 = vadd.f32 0.0, %v1710
    %v1712 = vpop.f32.mrb[0].mxu0
    %v1713 = vadd.f32 0.0, %v1712
    %v1714 = vpop.f32.mrb[0].mxu0
    %v1715 = vpop.f32.mrb[0].mxu0
    %1716 = vdwg.mxu0
    %1717 = vmatprep.subr.bf16.mxu0 0
    %1718 = vmatpush1.bf16.msra.mxu0 %v977
    %1719 = vmatprep.subr.bf16.mxu0 0
    %1720 = vmatpush1.bf16.msra.mxu0 %v980
    %1721 = vmatprep.subr.bf16.mxu0 0
    %1722 = vmatpush1.bf16.msra.mxu0 %v983
    %1723 = vmatprep.subr.bf16.mxu0 0
    %1724 = vmatpush1.bf16.msra.mxu0 %v986
    %1725 = vmatprep.subr.bf16.mxu0 0
    %1726 = vmatpush1.bf16.msra.mxu0 %v989
    %1727 = vmatprep.subr.bf16.mxu0 0
    %1728 = vmatpush1.bf16.msra.mxu0 %v992
    %1729 = vmatprep.subr.bf16.mxu0 0
    %1730 = vmatpush1.bf16.msra.mxu0 %v995
    %1731 = vmatprep.subr.bf16.mxu0 0
    %1732 = vmatpush1.bf16.msra.mxu0 %v998
    %1733 = vmatprep.subr.bf16.mxu0 0
    %1734 = vmatpush1.bf16.msra.mxu0 0
    %1735 = vmatprep.subr.bf16.mxu0 0
    %1736 = vmatpush1.bf16.msra.mxu0 0
    %1737 = vmatprep.subr.bf16.mxu0 0
    %1738 = vmatpush1.bf16.msra.mxu0 0
    %1739 = vmatprep.subr.bf16.mxu0 0
    %1740 = vmatpush1.bf16.msra.mxu0 0
    %1741 = vmatprep.subr.bf16.mxu0 0
    %1742 = vmatpush1.bf16.msra.mxu0 0
    %1743 = vmatprep.subr.bf16.mxu0 0
    %1744 = vmatpush1.bf16.msra.mxu0 0
    %1745 = vmatprep.subr.bf16.mxu0 0
    %1746 = vmatpush1.bf16.msra.mxu0 0
    %1747 = vmatprep.subr.bf16.mxu0 0
    %1748 = vmatpush1.bf16.msra.mxu0 0
    %1749 = vmatprep.mubr.bf16.mxu0 0
    %1750 = vmatmul.mubr.bf16.gmra.mrb[0].mxu0 %v1675
    %v1751 = vpop.f32.mrb[0].mxu0
    %v1752 = vadd.f32 0.0, %v1751
    %v1753 = vpop.f32.mrb[0].mxu0
    %v1754 = vpop.f32.mrb[0].mxu0
    %v1755 = vpop.f32.mrb[0].mxu0
    %1756 = vdwg.mxu0
    %v1757 = vadd.f32 %v1672, %v1711
    %v1758 = vxor.u32 %v1757, 2147483648
    %v1759 = vmul.f32 %v1758, 1.442695
    %v1760 = vpow.pop %v1759
    %v1761 = vadd.f32 %v1760, 1.0
    %v1762 = vrcp.pop %v1761
    %v1763 = vmul.f32 1.0, %v1762
    %v1764 = vadd.f32 %v1673, %v1713
    %v1765 = vxor.u32 %v1764, 2147483648
    %v1766 = vmul.f32 %v1765, 1.442695
    %v1767 = vpow.pop %v1766
    %v1768 = vadd.f32 %v1767, 1.0
    %v1769 = vrcp.pop %v1768
    %v1770 = vmul.f32 1.0, %v1769
    %v1771 = vadd.f32 %v1752, %v137
    %v1772 = vmul.f32 %v1763, %v1771
    %v1773 = vadd.f32 %v1674, %v1772
    %v1774 = vtanh.pop %v1773
    %v1775 = vsub.f32 1.0, %v1770
    %v1776 = vmul.f32 %v1775, %v1774
    %v1777 = vmul.f32 %v1770, %v1669
    %v1778 = vadd.f32 %v1776, %v1777
    %s1779 = scalar_lea.vmem [#allocation9], 48
    %1780 = vst [vmem:[%s1779] sm:$0xff] %v1778
    %v1781 = vld [vmem:[%s886] sm:$0xff]
    %v1782 = vld [vmem:[%s886 + $0x8] sm:$0xff]
    %v1783 = vld [vmem:[%s886 + $0x10] sm:$0xff]
    %v1784 = vpack.c.bf16 %v1778, %v1778
    %1785 = vmatprep.subr.bf16.mxu0 %v976
    %1786 = vmatpush1.bf16.msra.mxu0 %v975
    %1787 = vmatprep.subr.bf16.mxu0 %v979
    %1788 = vmatpush1.bf16.msra.mxu0 %v978
    %1789 = vmatprep.subr.bf16.mxu0 %v982
    %1790 = vmatpush1.bf16.msra.mxu0 %v981
    %1791 = vmatprep.subr.bf16.mxu0 %v985
    %1792 = vmatpush1.bf16.msra.mxu0 %v984
    %1793 = vmatprep.subr.bf16.mxu0 %v988
    %1794 = vmatpush1.bf16.msra.mxu0 %v987
    %1795 = vmatprep.subr.bf16.mxu0 %v991
    %1796 = vmatpush1.bf16.msra.mxu0 %v990
    %1797 = vmatprep.subr.bf16.mxu0 %v994
    %1798 = vmatpush1.bf16.msra.mxu0 %v993
    %1799 = vmatprep.subr.bf16.mxu0 %v997
    %1800 = vmatpush1.bf16.msra.mxu0 %v996
    %1801 = vmatprep.subr.bf16.mxu0 0
    %1802 = vmatpush1.bf16.msra.mxu0 0
    %1803 = vmatprep.subr.bf16.mxu0 0
    %1804 = vmatpush1.bf16.msra.mxu0 0
    %1805 = vmatprep.subr.bf16.mxu0 0
    %1806 = vmatpush1.bf16.msra.mxu0 0
    %1807 = vmatprep.subr.bf16.mxu0 0
    %1808 = vmatpush1.bf16.msra.mxu0 0
    %1809 = vmatprep.subr.bf16.mxu0 0
    %1810 = vmatpush1.bf16.msra.mxu0 0
    %1811 = vmatprep.subr.bf16.mxu0 0
    %1812 = vmatpush1.bf16.msra.mxu0 0
    %1813 = vmatprep.subr.bf16.mxu0 0
    %1814 = vmatpush1.bf16.msra.mxu0 0
    %1815 = vmatprep.subr.bf16.mxu0 0
    %1816 = vmatpush1.bf16.msra.mxu0 0
    %1817 = vmatprep.mubr.bf16.mxu0 0
    %1818 = vmatmul.mubr.bf16.gmra.mrb[0].mxu0 %v1784
    %v1819 = vpop.f32.mrb[0].mxu0
    %v1820 = vadd.f32 0.0, %v1819
    %v1821 = vpop.f32.mrb[0].mxu0
    %v1822 = vadd.f32 0.0, %v1821
    %v1823 = vpop.f32.mrb[0].mxu0
    %v1824 = vpop.f32.mrb[0].mxu0
    %1825 = vdwg.mxu0
    %1826 = vmatprep.subr.bf16.mxu0 0
    %1827 = vmatpush1.bf16.msra.mxu0 %v977
    %1828 = vmatprep.subr.bf16.mxu0 0
    %1829 = vmatpush1.bf16.msra.mxu0 %v980
    %1830 = vmatprep.subr.bf16.mxu0 0
    %1831 = vmatpush1.bf16.msra.mxu0 %v983
    %1832 = vmatprep.subr.bf16.mxu0 0
    %1833 = vmatpush1.bf16.msra.mxu0 %v986
    %1834 = vmatprep.subr.bf16.mxu0 0
    %1835 = vmatpush1.bf16.msra.mxu0 %v989
    %1836 = vmatprep.subr.bf16.mxu0 0
    %1837 = vmatpush1.bf16.msra.mxu0 %v992
    %1838 = vmatprep.subr.bf16.mxu0 0
    %1839 = vmatpush1.bf16.msra.mxu0 %v995
    %1840 = vmatprep.subr.bf16.mxu0 0
    %1841 = vmatpush1.bf16.msra.mxu0 %v998
    %1842 = vmatprep.subr.bf16.mxu0 0
    %1843 = vmatpush1.bf16.msra.mxu0 0
    %1844 = vmatprep.subr.bf16.mxu0 0
    %1845 = vmatpush1.bf16.msra.mxu0 0
    %1846 = vmatprep.subr.bf16.mxu0 0
    %1847 = vmatpush1.bf16.msra.mxu0 0
    %1848 = vmatprep.subr.bf16.mxu0 0
    %1849 = vmatpush1.bf16.msra.mxu0 0
    %1850 = vmatprep.subr.bf16.mxu0 0
    %1851 = vmatpush1.bf16.msra.mxu0 0
    %1852 = vmatprep.subr.bf16.mxu0 0
    %1853 = vmatpush1.bf16.msra.mxu0 0
    %1854 = vmatprep.subr.bf16.mxu0 0
    %1855 = vmatpush1.bf16.msra.mxu0 0
    %1856 = vmatprep.subr.bf16.mxu0 0
    %1857 = vmatpush1.bf16.msra.mxu0 0
    %1858 = vmatprep.mubr.bf16.mxu0 0
    %1859 = vmatmul.mubr.bf16.gmra.mrb[0].mxu0 %v1784
    %v1860 = vpop.f32.mrb[0].mxu0
    %v1861 = vadd.f32 0.0, %v1860
    %v1862 = vpop.f32.mrb[0].mxu0
    %v1863 = vpop.f32.mrb[0].mxu0
    %v1864 = vpop.f32.mrb[0].mxu0
    %1865 = vdwg.mxu0
    %v1866 = vadd.f32 %v1781, %v1820
    %v1867 = vxor.u32 %v1866, 2147483648
    %v1868 = vmul.f32 %v1867, 1.442695
    %v1869 = vpow.pop %v1868
    %v1870 = vadd.f32 %v1869, 1.0
    %v1871 = vrcp.pop %v1870
    %v1872 = vmul.f32 1.0, %v1871
    %v1873 = vadd.f32 %v1782, %v1822
    %v1874 = vxor.u32 %v1873, 2147483648
    %v1875 = vmul.f32 %v1874, 1.442695
    %v1876 = vpow.pop %v1875
    %v1877 = vadd.f32 %v1876, 1.0
    %v1878 = vrcp.pop %v1877
    %v1879 = vmul.f32 1.0, %v1878
    %v1880 = vadd.f32 %v1861, %v137
    %v1881 = vmul.f32 %v1872, %v1880
    %v1882 = vadd.f32 %v1783, %v1881
    %v1883 = vtanh.pop %v1882
    %v1884 = vsub.f32 1.0, %v1879
    %v1885 = vmul.f32 %v1884, %v1883
    %v1886 = vmul.f32 %v1879, %v1778
    %v1887 = vadd.f32 %v1885, %v1886
    %s1888 = scalar_lea.vmem [#allocation9], 56
    %1889 = vst [vmem:[%s1888] sm:$0xff] %v1887
    %1890 = vst [vmem:[#allocation10] sm:$0xff] %v1887
    // Predicated region
    $region42: #{tpu_custom_call.1} parent=1 // pred_check
      _
    $region43: #{tpu_custom_call.1} parent=1 // pred_check_branch
      %1892 = sbr.rel (0) target = $region45
    $region44: #{tpu_custom_call.1} parent=1 // pred_region
      %s1894 = ssub.s32 1024, 1024
      %1895 = vsyncadd [#allocation5], %s1894
      %s1896 = sshll.u32 [#allocation9], 4
      %s1897 = int_to_ptr.vmem [resolvable:$true] %s1896
      %1902 = dma.vmem_to_hbm [thread:$0]  %s1897, 1024, %s6, [#allocation5], 128, 128, 8
    $region45: #{tpu_custom_call.1} parent=1 // pred_fallthru
      _
    // Predicated region
    $region46: #{tpu_custom_call.1} parent=1 // pred_check
      _
    $region47: #{tpu_custom_call.1} parent=1 // pred_check_branch
      %1904 = sbr.rel (0) target = $region49
    $region48: #{tpu_custom_call.1} parent=1 // pred_region
      %s1906 = ssub.s32 128, 128
      %1907 = vsyncadd [#allocation11], %s1906
      %s1909 = sshll.u32 [#allocation10], 4
      %s1910 = int_to_ptr.vmem [resolvable:$true] %s1909
      %1912 = dma.vmem_to_hbm [thread:$0]  %s1910, 128, %s7, [#allocation11]
    $region49: #{tpu_custom_call.1} parent=1 // pred_fallthru
      _
    // Predicated region
    $region50: #{tpu_custom_call.1} parent=1 // pred_check
      _
    $region51: #{tpu_custom_call.1} parent=1 // pred_check_branch
      %1914 = sbr.rel (0) target = $region53
    $region52: #{tpu_custom_call.1} parent=1 // pred_region
      %1915 = dma.done [#allocation5], 1024
    $region53: #{tpu_custom_call.1} parent=1 // pred_fallthru
      _
    // Predicated region
    $region54: #{tpu_custom_call.1} parent=1 // pred_check
      _
    $region55: #{tpu_custom_call.1} parent=1 // pred_check_branch
      %1917 = sbr.rel (0) target = $region57
    $region56: #{tpu_custom_call.1} parent=1 // pred_region
      %1918 = dma.done [#allocation11], 128
    $region57: #{tpu_custom_call.1} parent=1 // pred_fallthru
      _
    %1919 = vsyncpa [#allocation4], 1
    %1920 = vsyncpa [#allocation7], 1
    %1921 = vsyncpa [#allocation5], 1
    %1922 = vsyncpa [#allocation11], 1

</llo_original>
